<compile_context>
chip_gen: v7x
topology: tpu7x:2x2x1
jax: 0.10.0
libtpu: 0.0.40
codegen_flags: <defaults>
</compile_context>

<pallas_src>
import math
from collections import OrderedDict

import numpy as np
import jax
import jax.numpy as jnp
from jax import lax
from jax.experimental import pallas as pl
from jax.experimental.pallas import tpu as pltpu


# ----------------------------------------------------------------------------
# Pallas kernel: 3D ROIAlign for one feature level, TR same-image ROIs per grid step
# ----------------------------------------------------------------------------
def _make_roi_align_kernel(C, D, H, W, oD, oH, oW, gs, TR):
    DHW = D * H * W
    oDHW = oD * oH * oW
    TRo = TR * oDHW
    inv_gs = 1.0 / float(gs)

    def axis_table(base, step, n_feat):
        # base/step: (1, TRo) per-output-row bin start / sample step (host precomputed).
        # Returns (n_feat, TRo): averaged 1-D linear-interp weight of every feature index
        # (sublanes) for every stacked output row (lanes).  All compare/select work stays at
        # this tiny, lane-dense footprint.
        fidx = lax.broadcasted_iota(jnp.int32, (n_feat, 1), 0).astype(jnp.float32)
        size = float(n_feat)
        acc = jnp.zeros((n_feat, TRo), jnp.float32)
        for s in range(gs):  # gs is small & static
            coord = base + (s + 0.5) * step                       # (1, TRo)
            valid = jnp.logical_and(coord >= -1.0, coord <= size)  # (1, TRo)
            cc = jnp.clip(coord, 0.0, size - 1.0)
            low = jnp.floor(cc)
            frac = cc - low
            w_lo = jnp.where(valid, 1.0 - frac, 0.0)
            w_hi = jnp.where(valid, frac, 0.0)
            acc = acc + jnp.where(fidx == low, w_lo, 0.0)
            acc = acc + jnp.where(fidx == low + 1.0, w_hi, 0.0)
        return acc * inv_gs

    def kernel(timg_ref, params_ref, ezT_ref, eyT_ref, exT_ref, feat_ref, out_ref):
        del timg_ref  # only consumed by the feature BlockSpec index_map (slab selection)

        p = params_ref[0]                                   # (8, TRo) per-row geometry
        wz = axis_table(p[0:1, :], p[1:2, :], D)            # (D, TRo)
        wy = axis_table(p[2:3, :], p[3:4, :], H)            # (H, TRo)
        wx = axis_table(p[4:5, :], p[5:6, :], W)            # (W, TRo)

        # Lift the small per-axis tables to the dense (DHW, TRo) trilinear slab: three 0/1
        # expansion matmuls (MXU) + only two full-footprint VPU multiplies.
        w_all = jnp.dot(ezT_ref[...], wz, preferred_element_type=jnp.float32)
        w_all = w_all * jnp.dot(eyT_ref[...], wy, preferred_element_type=jnp.float32)
        w_all = w_all * jnp.dot(exT_ref[...], wx, preferred_element_type=jnp.float32)

        f = feat_ref[0]                                     # (C, DHW) bf16 slab of tile's image
        res = jnp.dot(f, w_all.astype(f.dtype),
                      preferred_element_type=jnp.float32)   # (C, TRo) on the bf16 MXU path
        out_ref[0] = res.astype(out_ref.dtype)              # single unmasked lane-dense store

    return kernel


def roi_align_3d_pallas(feature, rois, output_size, spatial_scale, sampling_ratio):
    """feature: (N, C, D, H, W) f32; rois: (R, 7) f32 [batch_idx, x1,y1,z1,x2,y2,z2]."""
    feature = jnp.asarray(feature, jnp.float32)
    rois = np.asarray(rois, np.float32)
    N, C, D, H, W = (int(v) for v in feature.shape)
    oD, oH, oW = (int(v) for v in output_size)
    R = int(rois.shape[0])
    gs = int(sampling_ratio)
    if gs <= 0:
        # TODO(synk): adaptive sampling grid (sampling_ratio<=0) needs data-dependent loop
        # lengths; not supported in this static-shape kernel.
        raise NotImplementedError("sampling_ratio must be > 0")
    if R == 0:
        return jnp.zeros((0, C, oD, oH, oW), jnp.float32)

    DHW = D * H * W
    oDHW = oD * oH * oW
    TR = max(1, -(-128 // oDHW))          # ROIs per tile so the output lane dim is >= 128
    TRo = TR * oDHW

    # ---- host packing: group ROIs by image, pad each group to a multiple of TR ----------
    bidx = rois[:, 0].astype(np.int32)
    packed_src, tile_img = [], []
    for img in np.unique(bidx):
        idxs = np.nonzero(bidx == img)[0]
        n_tiles = -(-idxs.size // TR)
        packed_src.extend(idxs.tolist())
        packed_src.extend([-1] * (n_tiles * TR - idxs.size))
        tile_img.extend([int(img)] * n_tiles)
    packed_src = np.asarray(packed_src, np.int64)
    tile_img = np.asarray(tile_img, np.int32)
    T = int(tile_img.shape[0])
    R_pack = T * TR
    valid = packed_src >= 0

    boxes_p = np.zeros((R_pack, 6), np.float32)
    boxes_p[:, 3:] = 1.0                                    # harmless dummy boxes for padding
    boxes_p[valid] = rois[packed_src[valid], 1:7]

    # ---- per-ROI geometry (torchvision ROIAlign, aligned=False), row-expanded on host ----
    s = float(spatial_scale)
    x1, y1, z1 = boxes_p[:, 0] * s, boxes_p[:, 1] * s, boxes_p[:, 2] * s
    x2, y2, z2 = boxes_p[:, 3] * s, boxes_p[:, 4] * s, boxes_p[:, 5] * s
    bin_w = np.maximum(x2 - x1, 1.0) / oW
    bin_h = np.maximum(y2 - y1, 1.0) / oH
    bin_d = np.maximum(z2 - z1, 1.0) / oD

    ee = np.repeat(np.arange(oD), oH * oW).astype(np.float32)       # (oDHW,)
    bb = np.tile(np.repeat(np.arange(oH), oW), oD).astype(np.float32)
    aa = np.tile(np.arange(oW), oD * oH).astype(np.float32)

    rows = np.zeros((R_pack, oDHW, 8), np.float32)
    rows[:, :, 0] = z1[:, None] + ee[None, :] * bin_d[:, None]      # z bin start per row
    rows[:, :, 1] = (bin_d / gs)[:, None]                           # z sample step per row
    rows[:, :, 2] = y1[:, None] + bb[None, :] * bin_h[:, None]
    rows[:, :, 3] = (bin_h / gs)[:, None]
    rows[:, :, 4] = x1[:, None] + aa[None, :] * bin_w[:, None]
    rows[:, :, 5] = (bin_w / gs)[:, None]
    params = np.ascontiguousarray(rows.reshape(T, TRo, 8).transpose(0, 2, 1))  # (T, 8, TRo)

    # ---- static 0/1 expansion matrices lifting (axis, TRo) tables to (DHW, TRo) ----------
    cols = np.arange(DHW)
    ezT = (cols[:, None] // (H * W) == np.arange(D)[None, :]).astype(np.float32)
    eyT = ((cols[:, None] // W) % H == np.arange(H)[None, :]).astype(np.float32)
    exT = (cols[:, None] % W == np.arange(W)[None, :]).astype(np.float32)

    feat2d = feature.reshape(N, C, DHW).astype(jnp.bfloat16)

    # ---- VMEM budget derived from real chip capacity (64 MiB/TC on v7x) ------------------
    need = (2 * C * DHW * 2                 # per-image feature slab, double-buffered, bf16
            + 2 * (D + H + W) * DHW * 4     # expansion matrices (worst case double-buffered)
            + 2 * (8 + C) * TRo * 4 * 2     # params + output tiles
            + 4 * DHW * TRo * 4             # w_all chain + bf16 cast temporaries
            + (4 << 20))
    try:
        cap = int(pltpu.get_tpu_info().vmem_capacity_bytes)
    except Exception:
        cap = 64 << 20
    vmem_limit = int(min(max(need, 32 << 20), (cap * 7) // 8))
    # TODO(synk): levels whose per-image slab / dense weight slab exceed VMEM need a per-ROI
    # window-gather fallback (manual double-buffered make_async_copy from pl.ANY HBM refs).

    kernel = _make_roi_align_kernel(C, D, H, W, oD, oH, oW, gs, TR)

    def _resident_spec(shape):
        # Constant-index blocks are fetched once and never change; single-buffer when possible.
        index_map = lambda t, timg: (0,) * len(shape)
        if hasattr(pl, "Buffered"):
            try:
                return pl.BlockSpec(shape, index_map, pipeline_mode=pl.Buffered(1))
            except TypeError:
                pass
        return pl.BlockSpec(shape, index_map)

    grid_spec = pltpu.PrefetchScalarGridSpec(
        num_scalar_prefetch=1,                              # per-tile image id, lives in SMEM
        grid=(T,),
        in_specs=[
            pl.BlockSpec((1, 8, TRo), lambda t, timg: (t, 0, 0)),        # per-row geometry
            _resident_spec((DHW, D)),                                    # z expansion matrix
            _resident_spec((DHW, H)),                                    # y expansion matrix
            _resident_spec((DHW, W)),                                    # x expansion matrix
            pl.BlockSpec((1, C, DHW), lambda t, timg: (timg[t], 0, 0)),  # this tile's image
        ],
        out_specs=pl.BlockSpec((1, C, TRo), lambda t, timg: (t, 0, 0)),
    )

    out = pl.pallas_call(
        kernel,
        out_shape=jax.ShapeDtypeStruct((T, C, TRo), jnp.float32),
        grid_spec=grid_spec,
        compiler_params=pltpu.CompilerParams(
            dimension_semantics=("parallel",),              # ROI-tile axis shards across TCs
            vmem_limit_bytes=vmem_limit,
        ),
    )(jnp.asarray(tile_img), jnp.asarray(params), jnp.asarray(ezT),
      jnp.asarray(eyT), jnp.asarray(exT), feat2d)

    # (T, C, TR*oDHW) -> packed (R_pack, C, oD, oH, oW) -> original ROI order (layout only).
    out = out.reshape(T, C, TR, oDHW).transpose(0, 2, 1, 3).reshape(R_pack, C, oD, oH, oW)
    perm = np.zeros(R, np.int64)
    perm[packed_src[valid]] = np.nonzero(valid)[0]
    return out[jnp.asarray(perm)]


# ----------------------------------------------------------------------------
# Pure numpy reference (torchvision-style ROIAlign3D) for verification
# ----------------------------------------------------------------------------
def roi_align_3d_ref(feature, rois, output_size, spatial_scale, sampling_ratio):
    feature = np.asarray(feature, np.float32)
    rois = np.asarray(rois, np.float32)
    N, C, D, H, W = feature.shape
    oD, oH, oW = output_size
    R = rois.shape[0]
    gs = int(sampling_ratio)
    out = np.zeros((R, C, oD, oH, oW), np.float32)

    def interp1(coord, size):
        if coord < -1.0 or coord > size:
            return 0, 0, 0.0, 0.0
        c = min(max(coord, 0.0), size - 1.0)
        lo = int(np.floor(c))
        frac = c - lo
        hi = min(lo + 1, size - 1)
        return lo, hi, 1.0 - frac, frac

    for r in range(R):
        bi = int(rois[r, 0])
        x1, y1, z1, x2, y2, z2 = (rois[r, 1:7] * spatial_scale).tolist()
        rw, rh, rd = max(x2 - x1, 1.0), max(y2 - y1, 1.0), max(z2 - z1, 1.0)
        bw, bh, bd = rw / oW, rh / oH, rd / oD
        for e in range(oD):
            for b in range(oH):
                for a in range(oW):
                    acc = np.zeros(C, np.float32)
                    for sz in range(gs):
                        zc = z1 + e * bd + (sz + 0.5) * bd / gs
                        zl, zh, wzl, wzh = interp1(zc, D)
                        for sy in range(gs):
                            yc = y1 + b * bh + (sy + 0.5) * bh / gs
                            yl, yh, wyl, wyh = interp1(yc, H)
                            for sx in range(gs):
                                xc = x1 + a * bw + (sx + 0.5) * bw / gs
                                xl, xh, wxl, wxh = interp1(xc, W)
                                acc += (wzl * wyl * wxl * feature[bi, :, zl, yl, xl]
                                        + wzl * wyl * wxh * feature[bi, :, zl, yl, xh]
                                        + wzl * wyh * wxl * feature[bi, :, zl, yh, xl]
                                        + wzl * wyh * wxh * feature[bi, :, zl, yh, xh]
                                        + wzh * wyl * wxl * feature[bi, :, zh, yl, xl]
                                        + wzh * wyl * wxh * feature[bi, :, zh, yl, xh]
                                        + wzh * wyh * wxl * feature[bi, :, zh, yh, xl]
                                        + wzh * wyh * wxh * feature[bi, :, zh, yh, xh])
                    out[r, :, e, b, a] = acc / (gs ** 3)
    return out


# ----------------------------------------------------------------------------
# MultiScaleRoIAlign module (forward pass) — glue on host, hot path in Pallas
# ----------------------------------------------------------------------------
class MultiScaleRoIAlign:
    def __init__(self, featmap_names, output_size, sampling_ratio, *,
                 canonical_scale=224, canonical_level=4, roi_align_fn=None):
        if isinstance(output_size, int):
            output_size = (output_size, output_size, output_size)
        self.featmap_names = list(featmap_names)
        self.output_size = tuple(output_size)
        self.sampling_ratio = int(sampling_ratio)
        self.canonical_scale = canonical_scale
        self.canonical_level = canonical_level
        self.eps = 1e-6
        self.scales = None
        self.k_min = None
        self.k_max = None
        self.roi_align_fn = roi_align_fn if roi_align_fn is not None else roi_align_3d_pallas

    # _setup_scales / _infer_scale (matches the PyTorch module: uses possible_scales[0])
    def _setup_scales(self, feats, image_shapes):
        if not image_shapes:
            raise ValueError("images list should not be empty")
        max_z = max(s[0] for s in image_shapes)
        max_y = max(s[1] for s in image_shapes)
        max_x = max(s[2] for s in image_shapes)
        original = (max_z, max_y, max_x)
        scales = []
        for f in feats:
            size = f.shape[-3:]
            possible = [2.0 ** float(round(math.log2(float(s1) / float(s2))))
                        for s1, s2 in zip(size, original)]
            scales.append(possible[0])
        self.scales = scales
        self.k_min = int(-math.log2(scales[0]))
        self.k_max = int(-math.log2(scales[-1]))

    # LevelMapper
    def _map_levels(self, boxes_np):
        vols = np.concatenate([
            (b[:, 3] - b[:, 0]) * (b[:, 4] - b[:, 1]) * (b[:, 5] - b[:, 2])
            for b in boxes_np
        ]).astype(np.float32)
        s = np.power(vols, 1.0 / 3.0)
        target = np.floor(self.canonical_level + np.log2(s / self.canonical_scale) + self.eps)
        target = np.clip(target, self.k_min, self.k_max)
        return target.astype(np.int64) - self.k_min

    def __call__(self, x, boxes, image_shapes):
        # _filter_input
        feats = [v for k, v in x.items() if k in self.featmap_names]
        if self.scales is None or self.k_min is None:
            self._setup_scales(feats, image_shapes)

        # _convert_to_roi_format
        boxes_np = [np.asarray(b, np.float32) for b in boxes]
        concat = np.concatenate(boxes_np, axis=0)
        ids = np.concatenate([np.full((b.shape[0], 1), i, np.float32)
                              for i, b in enumerate(boxes_np)], axis=0)
        rois = np.concatenate([ids, concat], axis=1).astype(np.float32)  # (R, 7)

        levels = self._map_levels(boxes_np)
        num_rois = rois.shape[0]
        num_channels = feats[0].shape[1]
        result = jnp.zeros((num_rois, num_channels) + self.output_size, jnp.float32)

        # Per-level dispatch stays on host (data-dependent, like the PyTorch module); per-level
        # results are scattered back on device in original ROI order.
        for lvl, (feat, scale) in enumerate(zip(feats, self.scales)):
            idx = np.nonzero(levels == lvl)[0]
            if idx.size == 0:
                continue
            pooled = self.roi_align_fn(feat, rois[idx], self.output_size, scale,
                                       self.sampling_ratio)
            result = result.at[jnp.asarray(idx)].set(jnp.asarray(pooled, jnp.float32))
        return result


# ----------------------------------------------------------------------------
if __name__ == "__main__":
    key = jax.random.PRNGKey(0)
    kf1, kf2, kb1, kb2 = jax.random.split(key, 4)

    # Two FPN levels, NCDHW, same channel count, different spatial sizes.
    feat2 = jax.random.normal(kf1, (2, 4, 16, 16, 16), jnp.float32)
    feat3 = jax.random.normal(kf2, (2, 4, 8, 8, 8), jnp.float32)
    x = OrderedDict([("feat2", feat2), ("feat3", feat3)])

    def make_boxes(k, n):
        ka, kb = jax.random.split(k)
        lo = jax.random.uniform(ka, (n, 3), minval=0.0, maxval=18.0, dtype=jnp.float32)
        sz = jax.random.uniform(kb, (n, 3), minval=2.0, maxval=12.0, dtype=jnp.float32)
        hi = jnp.minimum(lo + sz, 31.0)
        return jnp.concatenate([lo, hi], axis=1)  # (x1, y1, z1, x2, y2, z2)

    boxes = [make_boxes(kb1, 3), make_boxes(kb2, 2)]
    image_shapes = [(32, 32, 32), (32, 32, 32)]

    pooler = MultiScaleRoIAlign(["feat2", "feat3"], output_size=(2, 2, 2),
                                sampling_ratio=2, canonical_scale=16, canonical_level=4)
    out = pooler(x, boxes, image_shapes)
    out = jax.block_until_ready(out)

    ref_pooler = MultiScaleRoIAlign(["feat2", "feat3"], output_size=(2, 2, 2),
                                    sampling_ratio=2, canonical_scale=16, canonical_level=4,
                                    roi_align_fn=roi_align_3d_ref)
    ref = ref_pooler(x, boxes, image_shapes)

    np.testing.assert_allclose(np.asarray(out), np.asarray(ref), rtol=2e-2, atol=2e-2)
    assert out.shape == (5, 4, 2, 2, 2)
    print("KERNEL_OK")
</pallas_src>

<mosaic_0001>
module attributes {stable_mosaic.version = 11 : i64} {
  func.func @kernel(%arg0: i32, %arg1: memref<2xi32, #tpu.memory_space<smem>>, %arg2: memref<1x8x128xf32, #tpu.memory_space<vmem>>, %arg3: memref<512x8xf32, #tpu.memory_space<vmem>>, %arg4: memref<512x8xf32, #tpu.memory_space<vmem>>, %arg5: memref<512x8xf32, #tpu.memory_space<vmem>>, %arg6: memref<1x4x512xbf16, #tpu.memory_space<vmem>>, %arg7: memref<1x4x128xf32, #tpu.memory_space<vmem>>) attributes {dimension_semantics = [#tpu.dimension_semantics<parallel>], iteration_bounds = array<i64: 2>, scalar_prefetch = 1 : i64, scratch_operands = 0 : i64, tpu.core_type = #tpu.core_type<tc>, window_params = [{transform_indices = @transform_0, window_bounds = array<i64: 1, 8, 128>}, {pipeline_mode = #tpu.pipeline_mode<synchronous>, transform_indices = @transform_1, window_bounds = array<i64: 512, 8>}, {pipeline_mode = #tpu.pipeline_mode<synchronous>, transform_indices = @transform_2, window_bounds = array<i64: 512, 8>}, {pipeline_mode = #tpu.pipeline_mode<synchronous>, transform_indices = @transform_3, window_bounds = array<i64: 512, 8>}, {transform_indices = @transform_4, window_bounds = array<i64: 1, 4, 512>}, {transform_indices = @transform_5, window_bounds = array<i64: 1, 4, 128>}]} {
    %c0 = arith.constant 0 : index
    %c0_0 = arith.constant 0 : index
    %c0_1 = arith.constant 0 : index
    %0 = vector.load %arg2[%c0, %c0_0, %c0_1] : memref<1x8x128xf32, #tpu.memory_space<vmem>>, vector<1x8x128xf32>
    %1 = vector.shape_cast %0 : vector<1x8x128xf32> to vector<8x128xf32>
    %2 = vector.extract_strided_slice %1 {offsets = [0, 0], sizes = [1, 128], strides = [1, 1]} : vector<8x128xf32> to vector<1x128xf32>
    %3 = vector.extract_strided_slice %1 {offsets = [1, 0], sizes = [1, 128], strides = [1, 1]} : vector<8x128xf32> to vector<1x128xf32>
    %4 = tpu.iota {dimensions = array<i32: 0>} : vector<8x1xi32>
    %5 = arith.sitofp %4 : vector<8x1xi32> to vector<8x1xf32>
    %cst = arith.constant 0.000000e+00 : f32
    %6 = vector.broadcast %cst : f32 to vector<8x128xf32>
    %cst_2 = arith.constant 5.000000e-01 : f32
    %7 = vector.broadcast %cst_2 : f32 to vector<1x128xf32>
    %8 = arith.mulf %7, %3 : vector<1x128xf32>
    %9 = arith.addf %2, %8 : vector<1x128xf32>
    %cst_3 = arith.constant -1.000000e+00 : f32
    %10 = vector.broadcast %cst_3 : f32 to vector<1x128xf32>
    %11 = arith.cmpf oge, %9, %10 : vector<1x128xf32>
    %cst_4 = arith.constant 8.000000e+00 : f32
    %12 = vector.broadcast %cst_4 : f32 to vector<1x128xf32>
    %13 = arith.cmpf ole, %9, %12 : vector<1x128xf32>
    %14 = arith.andi %11, %13 : vector<1x128xi1>
    %cst_5 = arith.constant 0.000000e+00 : f32
    %cst_6 = arith.constant 7.000000e+00 : f32
    %15 = vector.broadcast %cst_5 : f32 to vector<1x128xf32>
    %16 = arith.maximumf %15, %9 : vector<1x128xf32>
    %17 = vector.broadcast %cst_6 : f32 to vector<1x128xf32>
    %18 = arith.minimumf %17, %16 : vector<1x128xf32>
    %19 = math.floor %18 : vector<1x128xf32>
    %20 = arith.subf %18, %19 : vector<1x128xf32>
    %cst_7 = arith.constant 1.000000e+00 : f32
    %21 = vector.broadcast %cst_7 : f32 to vector<1x128xf32>
    %22 = arith.subf %21, %20 : vector<1x128xf32>
    %cst_8 = arith.constant 0.000000e+00 : f32
    %23 = vector.broadcast %cst_8 : f32 to vector<1x128xf32>
    %24 = arith.select %14, %22, %23 : vector<1x128xi1>, vector<1x128xf32>
    %cst_9 = arith.constant 0.000000e+00 : f32
    %25 = vector.broadcast %cst_9 : f32 to vector<1x128xf32>
    %26 = arith.select %14, %20, %25 : vector<1x128xi1>, vector<1x128xf32>
    %27 = vector.broadcast %5 : vector<8x1xf32> to vector<8x128xf32>
    %28 = vector.broadcast %19 : vector<1x128xf32> to vector<8x128xf32>
    %29 = arith.cmpf oeq, %27, %28 : vector<8x128xf32>
    %cst_10 = arith.constant 0.000000e+00 : f32
    %30 = vector.shape_cast %24 : vector<1x128xf32> to vector<1x128xf32>
    %31 = vector.broadcast %30 : vector<1x128xf32> to vector<8x128xf32>
    %32 = vector.broadcast %cst_10 : f32 to vector<8x128xf32>
    %33 = arith.select %29, %31, %32 : vector<8x128xi1>, vector<8x128xf32>
    %34 = arith.addf %6, %33 : vector<8x128xf32>
    %cst_11 = arith.constant 1.000000e+00 : f32
    %35 = vector.broadcast %cst_11 : f32 to vector<1x128xf32>
    %36 = arith.addf %19, %35 : vector<1x128xf32>
    %37 = vector.broadcast %5 : vector<8x1xf32> to vector<8x128xf32>
    %38 = vector.broadcast %36 : vector<1x128xf32> to vector<8x128xf32>
    %39 = arith.cmpf oeq, %37, %38 : vector<8x128xf32>
    %cst_12 = arith.constant 0.000000e+00 : f32
    %40 = vector.shape_cast %26 : vector<1x128xf32> to vector<1x128xf32>
    %41 = vector.broadcast %40 : vector<1x128xf32> to vector<8x128xf32>
    %42 = vector.broadcast %cst_12 : f32 to vector<8x128xf32>
    %43 = arith.select %39, %41, %42 : vector<8x128xi1>, vector<8x128xf32>
    %44 = arith.addf %34, %43 : vector<8x128xf32>
    %cst_13 = arith.constant 1.500000e+00 : f32
    %45 = vector.broadcast %cst_13 : f32 to vector<1x128xf32>
    %46 = arith.mulf %45, %3 : vector<1x128xf32>
    %47 = arith.addf %2, %46 : vector<1x128xf32>
    %cst_14 = arith.constant -1.000000e+00 : f32
    %48 = vector.broadcast %cst_14 : f32 to vector<1x128xf32>
    %49 = arith.cmpf oge, %47, %48 : vector<1x128xf32>
    %cst_15 = arith.constant 8.000000e+00 : f32
    %50 = vector.broadcast %cst_15 : f32 to vector<1x128xf32>
    %51 = arith.cmpf ole, %47, %50 : vector<1x128xf32>
    %52 = arith.andi %49, %51 : vector<1x128xi1>
    %cst_16 = arith.constant 0.000000e+00 : f32
    %cst_17 = arith.constant 7.000000e+00 : f32
    %53 = vector.broadcast %cst_16 : f32 to vector<1x128xf32>
    %54 = arith.maximumf %53, %47 : vector<1x128xf32>
    %55 = vector.broadcast %cst_17 : f32 to vector<1x128xf32>
    %56 = arith.minimumf %55, %54 : vector<1x128xf32>
    %57 = math.floor %56 : vector<1x128xf32>
    %58 = arith.subf %56, %57 : vector<1x128xf32>
    %cst_18 = arith.constant 1.000000e+00 : f32
    %59 = vector.broadcast %cst_18 : f32 to vector<1x128xf32>
    %60 = arith.subf %59, %58 : vector<1x128xf32>
    %cst_19 = arith.constant 0.000000e+00 : f32
    %61 = vector.broadcast %cst_19 : f32 to vector<1x128xf32>
    %62 = arith.select %52, %60, %61 : vector<1x128xi1>, vector<1x128xf32>
    %cst_20 = arith.constant 0.000000e+00 : f32
    %63 = vector.broadcast %cst_20 : f32 to vector<1x128xf32>
    %64 = arith.select %52, %58, %63 : vector<1x128xi1>, vector<1x128xf32>
    %65 = vector.broadcast %5 : vector<8x1xf32> to vector<8x128xf32>
    %66 = vector.broadcast %57 : vector<1x128xf32> to vector<8x128xf32>
    %67 = arith.cmpf oeq, %65, %66 : vector<8x128xf32>
    %cst_21 = arith.constant 0.000000e+00 : f32
    %68 = vector.shape_cast %62 : vector<1x128xf32> to vector<1x128xf32>
    %69 = vector.broadcast %68 : vector<1x128xf32> to vector<8x128xf32>
    %70 = vector.broadcast %cst_21 : f32 to vector<8x128xf32>
    %71 = arith.select %67, %69, %70 : vector<8x128xi1>, vector<8x128xf32>
    %72 = arith.addf %44, %71 : vector<8x128xf32>
    %cst_22 = arith.constant 1.000000e+00 : f32
    %73 = vector.broadcast %cst_22 : f32 to vector<1x128xf32>
    %74 = arith.addf %57, %73 : vector<1x128xf32>
    %75 = vector.broadcast %5 : vector<8x1xf32> to vector<8x128xf32>
    %76 = vector.broadcast %74 : vector<1x128xf32> to vector<8x128xf32>
    %77 = arith.cmpf oeq, %75, %76 : vector<8x128xf32>
    %cst_23 = arith.constant 0.000000e+00 : f32
    %78 = vector.shape_cast %64 : vector<1x128xf32> to vector<1x128xf32>
    %79 = vector.broadcast %78 : vector<1x128xf32> to vector<8x128xf32>
    %80 = vector.broadcast %cst_23 : f32 to vector<8x128xf32>
    %81 = arith.select %77, %79, %80 : vector<8x128xi1>, vector<8x128xf32>
    %82 = arith.addf %72, %81 : vector<8x128xf32>
    %cst_24 = arith.constant 5.000000e-01 : f32
    %83 = vector.broadcast %cst_24 : f32 to vector<8x128xf32>
    %84 = arith.mulf %82, %83 : vector<8x128xf32>
    %85 = vector.extract_strided_slice %1 {offsets = [2, 0], sizes = [1, 128], strides = [1, 1]} : vector<8x128xf32> to vector<1x128xf32>
    %86 = vector.extract_strided_slice %1 {offsets = [3, 0], sizes = [1, 128], strides = [1, 1]} : vector<8x128xf32> to vector<1x128xf32>
    %87 = tpu.iota {dimensions = array<i32: 0>} : vector<8x1xi32>
    %88 = arith.sitofp %87 : vector<8x1xi32> to vector<8x1xf32>
    %cst_25 = arith.constant 0.000000e+00 : f32
    %89 = vector.broadcast %cst_25 : f32 to vector<8x128xf32>
    %cst_26 = arith.constant 5.000000e-01 : f32
    %90 = vector.broadcast %cst_26 : f32 to vector<1x128xf32>
    %91 = arith.mulf %90, %86 : vector<1x128xf32>
    %92 = arith.addf %85, %91 : vector<1x128xf32>
    %cst_27 = arith.constant -1.000000e+00 : f32
    %93 = vector.broadcast %cst_27 : f32 to vector<1x128xf32>
    %94 = arith.cmpf oge, %92, %93 : vector<1x128xf32>
    %cst_28 = arith.constant 8.000000e+00 : f32
    %95 = vector.broadcast %cst_28 : f32 to vector<1x128xf32>
    %96 = arith.cmpf ole, %92, %95 : vector<1x128xf32>
    %97 = arith.andi %94, %96 : vector<1x128xi1>
    %cst_29 = arith.constant 0.000000e+00 : f32
    %cst_30 = arith.constant 7.000000e+00 : f32
    %98 = vector.broadcast %cst_29 : f32 to vector<1x128xf32>
    %99 = arith.maximumf %98, %92 : vector<1x128xf32>
    %100 = vector.broadcast %cst_30 : f32 to vector<1x128xf32>
    %101 = arith.minimumf %100, %99 : vector<1x128xf32>
    %102 = math.floor %101 : vector<1x128xf32>
    %103 = arith.subf %101, %102 : vector<1x128xf32>
    %cst_31 = arith.constant 1.000000e+00 : f32
    %104 = vector.broadcast %cst_31 : f32 to vector<1x128xf32>
    %105 = arith.subf %104, %103 : vector<1x128xf32>
    %cst_32 = arith.constant 0.000000e+00 : f32
    %106 = vector.broadcast %cst_32 : f32 to vector<1x128xf32>
    %107 = arith.select %97, %105, %106 : vector<1x128xi1>, vector<1x128xf32>
    %cst_33 = arith.constant 0.000000e+00 : f32
    %108 = vector.broadcast %cst_33 : f32 to vector<1x128xf32>
    %109 = arith.select %97, %103, %108 : vector<1x128xi1>, vector<1x128xf32>
    %110 = vector.broadcast %88 : vector<8x1xf32> to vector<8x128xf32>
    %111 = vector.broadcast %102 : vector<1x128xf32> to vector<8x128xf32>
    %112 = arith.cmpf oeq, %110, %111 : vector<8x128xf32>
    %cst_34 = arith.constant 0.000000e+00 : f32
    %113 = vector.shape_cast %107 : vector<1x128xf32> to vector<1x128xf32>
    %114 = vector.broadcast %113 : vector<1x128xf32> to vector<8x128xf32>
    %115 = vector.broadcast %cst_34 : f32 to vector<8x128xf32>
    %116 = arith.select %112, %114, %115 : vector<8x128xi1>, vector<8x128xf32>
    %117 = arith.addf %89, %116 : vector<8x128xf32>
    %cst_35 = arith.constant 1.000000e+00 : f32
    %118 = vector.broadcast %cst_35 : f32 to vector<1x128xf32>
    %119 = arith.addf %102, %118 : vector<1x128xf32>
    %120 = vector.broadcast %88 : vector<8x1xf32> to vector<8x128xf32>
    %121 = vector.broadcast %119 : vector<1x128xf32> to vector<8x128xf32>
    %122 = arith.cmpf oeq, %120, %121 : vector<8x128xf32>
    %cst_36 = arith.constant 0.000000e+00 : f32
    %123 = vector.shape_cast %109 : vector<1x128xf32> to vector<1x128xf32>
    %124 = vector.broadcast %123 : vector<1x128xf32> to vector<8x128xf32>
    %125 = vector.broadcast %cst_36 : f32 to vector<8x128xf32>
    %126 = arith.select %122, %124, %125 : vector<8x128xi1>, vector<8x128xf32>
    %127 = arith.addf %117, %126 : vector<8x128xf32>
    %cst_37 = arith.constant 1.500000e+00 : f32
    %128 = vector.broadcast %cst_37 : f32 to vector<1x128xf32>
    %129 = arith.mulf %128, %86 : vector<1x128xf32>
    %130 = arith.addf %85, %129 : vector<1x128xf32>
    %cst_38 = arith.constant -1.000000e+00 : f32
    %131 = vector.broadcast %cst_38 : f32 to vector<1x128xf32>
    %132 = arith.cmpf oge, %130, %131 : vector<1x128xf32>
    %cst_39 = arith.constant 8.000000e+00 : f32
    %133 = vector.broadcast %cst_39 : f32 to vector<1x128xf32>
    %134 = arith.cmpf ole, %130, %133 : vector<1x128xf32>
    %135 = arith.andi %132, %134 : vector<1x128xi1>
    %cst_40 = arith.constant 0.000000e+00 : f32
    %cst_41 = arith.constant 7.000000e+00 : f32
    %136 = vector.broadcast %cst_40 : f32 to vector<1x128xf32>
    %137 = arith.maximumf %136, %130 : vector<1x128xf32>
    %138 = vector.broadcast %cst_41 : f32 to vector<1x128xf32>
    %139 = arith.minimumf %138, %137 : vector<1x128xf32>
    %140 = math.floor %139 : vector<1x128xf32>
    %141 = arith.subf %139, %140 : vector<1x128xf32>
    %cst_42 = arith.constant 1.000000e+00 : f32
    %142 = vector.broadcast %cst_42 : f32 to vector<1x128xf32>
    %143 = arith.subf %142, %141 : vector<1x128xf32>
    %cst_43 = arith.constant 0.000000e+00 : f32
    %144 = vector.broadcast %cst_43 : f32 to vector<1x128xf32>
    %145 = arith.select %135, %143, %144 : vector<1x128xi1>, vector<1x128xf32>
    %cst_44 = arith.constant 0.000000e+00 : f32
    %146 = vector.broadcast %cst_44 : f32 to vector<1x128xf32>
    %147 = arith.select %135, %141, %146 : vector<1x128xi1>, vector<1x128xf32>
    %148 = vector.broadcast %88 : vector<8x1xf32> to vector<8x128xf32>
    %149 = vector.broadcast %140 : vector<1x128xf32> to vector<8x128xf32>
    %150 = arith.cmpf oeq, %148, %149 : vector<8x128xf32>
    %cst_45 = arith.constant 0.000000e+00 : f32
    %151 = vector.shape_cast %145 : vector<1x128xf32> to vector<1x128xf32>
    %152 = vector.broadcast %151 : vector<1x128xf32> to vector<8x128xf32>
    %153 = vector.broadcast %cst_45 : f32 to vector<8x128xf32>
    %154 = arith.select %150, %152, %153 : vector<8x128xi1>, vector<8x128xf32>
    %155 = arith.addf %127, %154 : vector<8x128xf32>
    %cst_46 = arith.constant 1.000000e+00 : f32
    %156 = vector.broadcast %cst_46 : f32 to vector<1x128xf32>
    %157 = arith.addf %140, %156 : vector<1x128xf32>
    %158 = vector.broadcast %88 : vector<8x1xf32> to vector<8x128xf32>
    %159 = vector.broadcast %157 : vector<1x128xf32> to vector<8x128xf32>
    %160 = arith.cmpf oeq, %158, %159 : vector<8x128xf32>
    %cst_47 = arith.constant 0.000000e+00 : f32
    %161 = vector.shape_cast %147 : vector<1x128xf32> to vector<1x128xf32>
    %162 = vector.broadcast %161 : vector<1x128xf32> to vector<8x128xf32>
    %163 = vector.broadcast %cst_47 : f32 to vector<8x128xf32>
    %164 = arith.select %160, %162, %163 : vector<8x128xi1>, vector<8x128xf32>
    %165 = arith.addf %155, %164 : vector<8x128xf32>
    %cst_48 = arith.constant 5.000000e-01 : f32
    %166 = vector.broadcast %cst_48 : f32 to vector<8x128xf32>
    %167 = arith.mulf %165, %166 : vector<8x128xf32>
    %168 = vector.extract_strided_slice %1 {offsets = [4, 0], sizes = [1, 128], strides = [1, 1]} : vector<8x128xf32> to vector<1x128xf32>
    %169 = vector.extract_strided_slice %1 {offsets = [5, 0], sizes = [1, 128], strides = [1, 1]} : vector<8x128xf32> to vector<1x128xf32>
    %170 = tpu.iota {dimensions = array<i32: 0>} : vector<8x1xi32>
    %171 = arith.sitofp %170 : vector<8x1xi32> to vector<8x1xf32>
    %cst_49 = arith.constant 0.000000e+00 : f32
    %172 = vector.broadcast %cst_49 : f32 to vector<8x128xf32>
    %cst_50 = arith.constant 5.000000e-01 : f32
    %173 = vector.broadcast %cst_50 : f32 to vector<1x128xf32>
    %174 = arith.mulf %173, %169 : vector<1x128xf32>
    %175 = arith.addf %168, %174 : vector<1x128xf32>
    %cst_51 = arith.constant -1.000000e+00 : f32
    %176 = vector.broadcast %cst_51 : f32 to vector<1x128xf32>
    %177 = arith.cmpf oge, %175, %176 : vector<1x128xf32>
    %cst_52 = arith.constant 8.000000e+00 : f32
    %178 = vector.broadcast %cst_52 : f32 to vector<1x128xf32>
    %179 = arith.cmpf ole, %175, %178 : vector<1x128xf32>
    %180 = arith.andi %177, %179 : vector<1x128xi1>
    %cst_53 = arith.constant 0.000000e+00 : f32
    %cst_54 = arith.constant 7.000000e+00 : f32
    %181 = vector.broadcast %cst_53 : f32 to vector<1x128xf32>
    %182 = arith.maximumf %181, %175 : vector<1x128xf32>
    %183 = vector.broadcast %cst_54 : f32 to vector<1x128xf32>
    %184 = arith.minimumf %183, %182 : vector<1x128xf32>
    %185 = math.floor %184 : vector<1x128xf32>
    %186 = arith.subf %184, %185 : vector<1x128xf32>
    %cst_55 = arith.constant 1.000000e+00 : f32
    %187 = vector.broadcast %cst_55 : f32 to vector<1x128xf32>
    %188 = arith.subf %187, %186 : vector<1x128xf32>
    %cst_56 = arith.constant 0.000000e+00 : f32
    %189 = vector.broadcast %cst_56 : f32 to vector<1x128xf32>
    %190 = arith.select %180, %188, %189 : vector<1x128xi1>, vector<1x128xf32>
    %cst_57 = arith.constant 0.000000e+00 : f32
    %191 = vector.broadcast %cst_57 : f32 to vector<1x128xf32>
    %192 = arith.select %180, %186, %191 : vector<1x128xi1>, vector<1x128xf32>
    %193 = vector.broadcast %171 : vector<8x1xf32> to vector<8x128xf32>
    %194 = vector.broadcast %185 : vector<1x128xf32> to vector<8x128xf32>
    %195 = arith.cmpf oeq, %193, %194 : vector<8x128xf32>
    %cst_58 = arith.constant 0.000000e+00 : f32
    %196 = vector.shape_cast %190 : vector<1x128xf32> to vector<1x128xf32>
    %197 = vector.broadcast %196 : vector<1x128xf32> to vector<8x128xf32>
    %198 = vector.broadcast %cst_58 : f32 to vector<8x128xf32>
    %199 = arith.select %195, %197, %198 : vector<8x128xi1>, vector<8x128xf32>
    %200 = arith.addf %172, %199 : vector<8x128xf32>
    %cst_59 = arith.constant 1.000000e+00 : f32
    %201 = vector.broadcast %cst_59 : f32 to vector<1x128xf32>
    %202 = arith.addf %185, %201 : vector<1x128xf32>
    %203 = vector.broadcast %171 : vector<8x1xf32> to vector<8x128xf32>
    %204 = vector.broadcast %202 : vector<1x128xf32> to vector<8x128xf32>
    %205 = arith.cmpf oeq, %203, %204 : vector<8x128xf32>
    %cst_60 = arith.constant 0.000000e+00 : f32
    %206 = vector.shape_cast %192 : vector<1x128xf32> to vector<1x128xf32>
    %207 = vector.broadcast %206 : vector<1x128xf32> to vector<8x128xf32>
    %208 = vector.broadcast %cst_60 : f32 to vector<8x128xf32>
    %209 = arith.select %205, %207, %208 : vector<8x128xi1>, vector<8x128xf32>
    %210 = arith.addf %200, %209 : vector<8x128xf32>
    %cst_61 = arith.constant 1.500000e+00 : f32
    %211 = vector.broadcast %cst_61 : f32 to vector<1x128xf32>
    %212 = arith.mulf %211, %169 : vector<1x128xf32>
    %213 = arith.addf %168, %212 : vector<1x128xf32>
    %cst_62 = arith.constant -1.000000e+00 : f32
    %214 = vector.broadcast %cst_62 : f32 to vector<1x128xf32>
    %215 = arith.cmpf oge, %213, %214 : vector<1x128xf32>
    %cst_63 = arith.constant 8.000000e+00 : f32
    %216 = vector.broadcast %cst_63 : f32 to vector<1x128xf32>
    %217 = arith.cmpf ole, %213, %216 : vector<1x128xf32>
    %218 = arith.andi %215, %217 : vector<1x128xi1>
    %cst_64 = arith.constant 0.000000e+00 : f32
    %cst_65 = arith.constant 7.000000e+00 : f32
    %219 = vector.broadcast %cst_64 : f32 to vector<1x128xf32>
    %220 = arith.maximumf %219, %213 : vector<1x128xf32>
    %221 = vector.broadcast %cst_65 : f32 to vector<1x128xf32>
    %222 = arith.minimumf %221, %220 : vector<1x128xf32>
    %223 = math.floor %222 : vector<1x128xf32>
    %224 = arith.subf %222, %223 : vector<1x128xf32>
    %cst_66 = arith.constant 1.000000e+00 : f32
    %225 = vector.broadcast %cst_66 : f32 to vector<1x128xf32>
    %226 = arith.subf %225, %224 : vector<1x128xf32>
    %cst_67 = arith.constant 0.000000e+00 : f32
    %227 = vector.broadcast %cst_67 : f32 to vector<1x128xf32>
    %228 = arith.select %218, %226, %227 : vector<1x128xi1>, vector<1x128xf32>
    %cst_68 = arith.constant 0.000000e+00 : f32
    %229 = vector.broadcast %cst_68 : f32 to vector<1x128xf32>
    %230 = arith.select %218, %224, %229 : vector<1x128xi1>, vector<1x128xf32>
    %231 = vector.broadcast %171 : vector<8x1xf32> to vector<8x128xf32>
    %232 = vector.broadcast %223 : vector<1x128xf32> to vector<8x128xf32>
    %233 = arith.cmpf oeq, %231, %232 : vector<8x128xf32>
    %cst_69 = arith.constant 0.000000e+00 : f32
    %234 = vector.shape_cast %228 : vector<1x128xf32> to vector<1x128xf32>
    %235 = vector.broadcast %234 : vector<1x128xf32> to vector<8x128xf32>
    %236 = vector.broadcast %cst_69 : f32 to vector<8x128xf32>
    %237 = arith.select %233, %235, %236 : vector<8x128xi1>, vector<8x128xf32>
    %238 = arith.addf %210, %237 : vector<8x128xf32>
    %cst_70 = arith.constant 1.000000e+00 : f32
    %239 = vector.broadcast %cst_70 : f32 to vector<1x128xf32>
    %240 = arith.addf %223, %239 : vector<1x128xf32>
    %241 = vector.broadcast %171 : vector<8x1xf32> to vector<8x128xf32>
    %242 = vector.broadcast %240 : vector<1x128xf32> to vector<8x128xf32>
    %243 = arith.cmpf oeq, %241, %242 : vector<8x128xf32>
    %cst_71 = arith.constant 0.000000e+00 : f32
    %244 = vector.shape_cast %230 : vector<1x128xf32> to vector<1x128xf32>
    %245 = vector.broadcast %244 : vector<1x128xf32> to vector<8x128xf32>
    %246 = vector.broadcast %cst_71 : f32 to vector<8x128xf32>
    %247 = arith.select %243, %245, %246 : vector<8x128xi1>, vector<8x128xf32>
    %248 = arith.addf %238, %247 : vector<8x128xf32>
    %cst_72 = arith.constant 5.000000e-01 : f32
    %249 = vector.broadcast %cst_72 : f32 to vector<8x128xf32>
    %250 = arith.mulf %248, %249 : vector<8x128xf32>
    %c0_73 = arith.constant 0 : index
    %c0_74 = arith.constant 0 : index
    %251 = vector.load %arg3[%c0_73, %c0_74] : memref<512x8xf32, #tpu.memory_space<vmem>>, vector<512x8xf32>
    %cst_75 = arith.constant dense<0.000000e+00> : vector<512x128xf32>
    %252 = tpu.matmul %251, %84, %cst_75 {dimension_numbers = #tpu.dot_dimension_numbers<[1], [0], [0], [1], [0, 0, 1, 1], [], []>} : vector<512x8xf32>, vector<8x128xf32>, vector<512x128xf32> -> vector<512x128xf32>
    %c0_76 = arith.constant 0 : index
    %c0_77 = arith.constant 0 : index
    %253 = vector.load %arg4[%c0_76, %c0_77] : memref<512x8xf32, #tpu.memory_space<vmem>>, vector<512x8xf32>
    %cst_78 = arith.constant dense<0.000000e+00> : vector<512x128xf32>
    %254 = tpu.matmul %253, %167, %cst_78 {dimension_numbers = #tpu.dot_dimension_numbers<[1], [0], [0], [1], [0, 0, 1, 1], [], []>} : vector<512x8xf32>, vector<8x128xf32>, vector<512x128xf32> -> vector<512x128xf32>
    %255 = arith.mulf %252, %254 : vector<512x128xf32>
    %c0_79 = arith.constant 0 : index
    %c0_80 = arith.constant 0 : index
    %256 = vector.load %arg5[%c0_79, %c0_80] : memref<512x8xf32, #tpu.memory_space<vmem>>, vector<512x8xf32>
    %cst_81 = arith.constant dense<0.000000e+00> : vector<512x128xf32>
    %257 = tpu.matmul %256, %250, %cst_81 {dimension_numbers = #tpu.dot_dimension_numbers<[1], [0], [0], [1], [0, 0, 1, 1], [], []>} : vector<512x8xf32>, vector<8x128xf32>, vector<512x128xf32> -> vector<512x128xf32>
    %258 = arith.mulf %255, %257 : vector<512x128xf32>
    %c0_82 = arith.constant 0 : index
    %c0_83 = arith.constant 0 : index
    %c0_84 = arith.constant 0 : index
    %259 = vector.load %arg6[%c0_82, %c0_83, %c0_84] : memref<1x4x512xbf16, #tpu.memory_space<vmem>>, vector<1x4x512xbf16>
    %260 = vector.shape_cast %259 : vector<1x4x512xbf16> to vector<4x512xbf16>
    %261 = arith.truncf %258 : vector<512x128xf32> to vector<512x128xbf16>
    %cst_85 = arith.constant dense<0.000000e+00> : vector<4x128xf32>
    %262 = tpu.matmul %260, %261, %cst_85 {dimension_numbers = #tpu.dot_dimension_numbers<[1], [0], [0], [1], [0, 0, 1, 1], [], []>} : vector<4x512xbf16>, vector<512x128xbf16>, vector<4x128xf32> -> vector<4x128xf32>
    %c0_86 = arith.constant 0 : index
    %c0_87 = arith.constant 0 : index
    %c0_88 = arith.constant 0 : index
    %263 = vector.load %arg7[%c0_86, %c0_87, %c0_88] : memref<1x4x128xf32, #tpu.memory_space<vmem>>, vector<1x4x128xf32>
    %264 = vector.shape_cast %263 : vector<1x4x128xf32> to vector<4x128xf32>
    %265 = vector.shape_cast %262 : vector<4x128xf32> to vector<1x4x128xf32>
    tpu.vector_store %arg7[%c0_86, %c0_87, %c0_88], %265 {strides = array<i32>} : memref<1x4x128xf32, #tpu.memory_space<vmem>>, vector<1x4x128xf32>,
    return
  }
  func.func @transform_0(%arg0: i32, %arg1: memref<2xi32, #tpu.memory_space<smem>>) -> (i32, i32, i32) {
    %c0_i32 = arith.constant 0 : i32
    %c0_i32_0 = arith.constant 0 : i32
    %c0_i32_1 = arith.constant 0 : i32
    return %arg0, %c0_i32, %c0_i32_0 : i32, i32, i32
  }
  func.func @transform_1(%arg0: i32, %arg1: memref<2xi32, #tpu.memory_space<smem>>) -> (i32, i32) {
    %c0_i32 = arith.constant 0 : i32
    %c0_i32_0 = arith.constant 0 : i32
    %c0_i32_1 = arith.constant 0 : i32
    return %c0_i32, %c0_i32_0 : i32, i32
  }
  func.func @transform_2(%arg0: i32, %arg1: memref<2xi32, #tpu.memory_space<smem>>) -> (i32, i32) {
    %c0_i32 = arith.constant 0 : i32
    %c0_i32_0 = arith.constant 0 : i32
    %c0_i32_1 = arith.constant 0 : i32
    return %c0_i32, %c0_i32_0 : i32, i32
  }
  func.func @transform_3(%arg0: i32, %arg1: memref<2xi32, #tpu.memory_space<smem>>) -> (i32, i32) {
    %c0_i32 = arith.constant 0 : i32
    %c0_i32_0 = arith.constant 0 : i32
    %c0_i32_1 = arith.constant 0 : i32
    return %c0_i32, %c0_i32_0 : i32, i32
  }
  func.func @transform_4(%arg0: i32, %arg1: memref<2xi32, #tpu.memory_space<smem>>) -> (i32, i32, i32) {
    %0 = arith.index_cast %arg0 : i32 to index
    %1 = memref.load %arg1[%0] : memref<2xi32, #tpu.memory_space<smem>>
    %c0_i32 = arith.constant 0 : i32
    %c0_i32_0 = arith.constant 0 : i32
    %c0_i32_1 = arith.constant 0 : i32
    return %1, %c0_i32, %c0_i32_0 : i32, i32, i32
  }
  func.func @transform_5(%arg0: i32, %arg1: memref<2xi32, #tpu.memory_space<smem>>) -> (i32, i32, i32) {
    %c0_i32 = arith.constant 0 : i32
    %c0_i32_0 = arith.constant 0 : i32
    %c0_i32_1 = arith.constant 0 : i32
    return %arg0, %c0_i32, %c0_i32_0 : i32, i32, i32
  }
}

</mosaic_0001>

<llo_original>
// kernel: tpu_custom_call.1
$region0: #{tpu_custom_call.1}
  #allocation0 [shape = 'u32[]', space=smem, size = 0x4, offset = 0x4, fixed_abs, tag = 'smem constant byte address 0x4 - core index']
  #allocation1 [shape = 'u32[144,128]{1,0:T(1,128)}', space=vmem, size = 0x12000, scoped, tag = 'internal scratch']
  #allocation2 [shape = 's32[1]{0}', space=sflag, size = 0x4, scoped, tag = 'scoped memory for tpu_custom_call.1']
  #allocation3 [shape = 'u8[512]{0}', space=smem, size = 0x200, scoped, tag = 'prefetched SMEM operand 0']
  %s0 = inlined_call_operand.vmem [shape: s32[2], index: 0, kind: input, shape index: {}]
  %s1 = inlined_call_operand.vmem [shape: f32[2,8,128], index: 1, kind: input, shape index: {}]
  %s2 = inlined_call_operand.vmem [shape: f32[512,8], index: 2, kind: input, shape index: {}]
  %s3 = inlined_call_operand.vmem [shape: f32[512,8], index: 3, kind: input, shape index: {}]
  %s4 = inlined_call_operand.vmem [shape: f32[512,8], index: 4, kind: input, shape index: {}]
  %s5 = inlined_call_operand.vmem [shape: bf16[2,4,512], index: 5, kind: input, shape index: {}]
  %s6 = inlined_call_operand.hbm [shape: f32[2,4,128], index: 6, kind: output, shape index: {}]
  %s7 = sld [smem:[#allocation0]]
  $region53: #{tpu_custom_call.1} parent=0
    _
  %s9 = ssub.s32 1, %s7
  %s10 = scalar_select 0, %s9, %s7
  %s11 = sshll.u32 %s0, 4
  %s12 = int_to_ptr.vmem [resolvable:$true] %s11
  %14 = dma.vmem_to_smem %s12, 16, [#allocation3], [#allocation2]
  %15 = dma.done [#allocation2], 16
  %16 = sfence
  $region1: #{tpu_custom_call.1} parent=0
    #allocation4 [shape = 'u8[4096]{0}', space=vmem, size = 0x1000, scoped, tag = 'output window, operand 0']
    #allocation5 [shape = 's32[2]{0}', space=sflag, size = 0x8, scoped, tag = 'scoped memory for tpu_custom_call.1']
    %17 = vsyncpa [#allocation5], 0
    %s18 = scalar_lea.sflag [#allocation5], 1
    %19 = vsyncpa %s18, 0
    loop: start=0, step=1, limit=4
    $region2: #{tpu_custom_call.1} parent=1 // loop_pre_header
      _
    $region3: #{tpu_custom_call.1} parent=1 // loop_header
      %s21 = sphi 0, %s25
      %p22 = scmp.ge.s32.totalorder %s21, 4
      %s31 = sphi 0, %s33
      %s34 = sphi 0, %s31
      %s35 = sphi 0, %s34
      %s51 = sphi 0, %s35
      %s55 = sphi 0, %s55
      %s57 = sphi 0, %s55
      %s58 = sphi 0, %s57
      %s72 = sphi 0, %s58
      %s76 = sphi 0, %s76
      %s78 = sphi 0, %s76
      %s79 = sphi 0, %s78
      %s93 = sphi 0, %s79
      %s97 = sphi 0, %s97
      %s99 = sphi 0, %s97
      %s100 = sphi 0, %s99
      %s114 = sphi 0, %s100
      %s122 = sphi 0, %s124
      %s125 = sphi 0, %s122
      %s126 = sphi 0, %s125
      %s142 = sphi 0, %s126
      %s148 = sphi 0, %s150
      %s151 = sphi 0, %s148
      %s152 = sphi 0, %s151
      %s168 = sphi 0, %s152
    $region4: #{tpu_custom_call.1} parent=1 // loop_header_branch
      %24 = sbr.rel (%p22) target = $region8
    $region5: #{tpu_custom_call.1} parent=1 // loop_body
      %s26 = ssub.s32 %s21, 1
      %s27 = ssub.s32 %s21, 2
      %s28 = sadd.s32 %s21, 1
      %s29 = ssub.s32 %s21, %s28
      %p30 = scmp.eq.s32.totalorder %s29, 0
      %s32 = sadd.s32 %s31, 1
      %s33 = scalar_select %p30, %s31, %s32
      %p36 = pneg %p30
      %p37 = scmp.eq.s32.totalorder %s21, 1
      %p38 = por %p36, %p37
      %p39 = scmp.ne.s32.totalorder %s31, %s34
      %p40 = scmp.eq.s32.totalorder %s21, 0
      %p41 = por %p39, %p40
      %p42 = scmp.ne.s32.totalorder %s31, %s34
      %p43 = scmp.eq.s32.totalorder %s26, 1
      %p44 = por %p42, %p43
      %p45 = scmp.ne.s32.totalorder %s34, %s35
      %p46 = scmp.eq.s32.totalorder %s26, 0
      %p47 = por %p45, %p46
      %p48 = scmp.ne.s32.totalorder %s34, %s35
      %p49 = scmp.eq.s32.totalorder %s27, 1
      %p50 = por %p48, %p49
      %p52 = scmp.ne.s32.totalorder %s35, %s51
      %p53 = scmp.eq.s32.totalorder %s27, 0
      %p54 = por %p52, %p53
      %s56 = sadd.s32 %s55, 1
      %p59 = scmp.eq.s32.totalorder %s21, 1
      %p60 = scmp.ne.s32.totalorder %s55, %s57
      %p61 = scmp.eq.s32.totalorder %s21, 0
      %p62 = por %p60, %p61
      %p63 = scmp.ne.s32.totalorder %s55, %s57
      %p64 = scmp.eq.s32.totalorder %s26, 1
      %p65 = por %p63, %p64
      %p66 = scmp.ne.s32.totalorder %s57, %s58
      %p67 = scmp.eq.s32.totalorder %s26, 0
      %p68 = por %p66, %p67
      %p69 = scmp.ne.s32.totalorder %s57, %s58
      %p70 = scmp.eq.s32.totalorder %s27, 1
      %p71 = por %p69, %p70
      %p73 = scmp.ne.s32.totalorder %s58, %s72
      %p74 = scmp.eq.s32.totalorder %s27, 0
      %p75 = por %p73, %p74
      %s77 = sadd.s32 %s76, 1
      %p80 = scmp.eq.s32.totalorder %s21, 1
      %p81 = scmp.ne.s32.totalorder %s76, %s78
      %p82 = scmp.eq.s32.totalorder %s21, 0
      %p83 = por %p81, %p82
      %p84 = scmp.ne.s32.totalorder %s76, %s78
      %p85 = scmp.eq.s32.totalorder %s26, 1
      %p86 = por %p84, %p85
      %p87 = scmp.ne.s32.totalorder %s78, %s79
      %p88 = scmp.eq.s32.totalorder %s26, 0
      %p89 = por %p87, %p88
      %p90 = scmp.ne.s32.totalorder %s78, %s79
      %p91 = scmp.eq.s32.totalorder %s27, 1
      %p92 = por %p90, %p91
      %p94 = scmp.ne.s32.totalorder %s79, %s93
      %p95 = scmp.eq.s32.totalorder %s27, 0
      %p96 = por %p94, %p95
      %s98 = sadd.s32 %s97, 1
      %p101 = scmp.eq.s32.totalorder %s21, 1
      %p102 = scmp.ne.s32.totalorder %s97, %s99
      %p103 = scmp.eq.s32.totalorder %s21, 0
      %p104 = por %p102, %p103
      %p105 = scmp.ne.s32.totalorder %s97, %s99
      %p106 = scmp.eq.s32.totalorder %s26, 1
      %p107 = por %p105, %p106
      %p108 = scmp.ne.s32.totalorder %s99, %s100
      %p109 = scmp.eq.s32.totalorder %s26, 0
      %p110 = por %p108, %p109
      %p111 = scmp.ne.s32.totalorder %s99, %s100
      %p112 = scmp.eq.s32.totalorder %s27, 1
      %p113 = por %p111, %p112
      %p115 = scmp.ne.s32.totalorder %s100, %s114
      %p116 = scmp.eq.s32.totalorder %s27, 0
      %p117 = por %p115, %p116
      %s118 = sld [smem:[#allocation3 + %s21]]
      %s119 = sld [smem:[#allocation3 + %s28]]
      %s120 = ssub.s32 %s118, %s119
      %p121 = scmp.eq.s32.totalorder %s120, 0
      %s123 = sadd.s32 %s122, 1
      %s124 = scalar_select %p121, %s122, %s123
      %p127 = pneg %p121
      %p128 = scmp.eq.s32.totalorder %s21, 1
      %p129 = por %p127, %p128
      %p130 = scmp.ne.s32.totalorder %s122, %s125
      %p131 = scmp.eq.s32.totalorder %s21, 0
      %p132 = por %p130, %p131
      %p133 = scmp.ne.s32.totalorder %s122, %s125
      %p134 = scmp.eq.s32.totalorder %s26, 1
      %p135 = por %p133, %p134
      %p136 = scmp.ne.s32.totalorder %s125, %s126
      %p137 = scmp.eq.s32.totalorder %s26, 0
      %p138 = por %p136, %p137
      %p139 = scmp.ne.s32.totalorder %s125, %s126
      %p140 = scmp.eq.s32.totalorder %s27, 1
      %p141 = por %p139, %p140
      %p143 = scmp.ne.s32.totalorder %s126, %s142
      %p144 = scmp.eq.s32.totalorder %s27, 0
      %p145 = por %p143, %p144
      %s146 = ssub.s32 %s21, %s28
      %p147 = scmp.eq.s32.totalorder %s146, 0
      %s149 = sadd.s32 %s148, 1
      %s150 = scalar_select %p147, %s148, %s149
      %p153 = pneg %p147
      %p154 = scmp.eq.s32.totalorder %s21, 1
      %p155 = por %p153, %p154
      %p156 = scmp.ne.s32.totalorder %s148, %s151
      %p157 = scmp.eq.s32.totalorder %s21, 0
      %p158 = por %p156, %p157
      %p159 = scmp.ne.s32.totalorder %s148, %s151
      %p160 = scmp.eq.s32.totalorder %s26, 1
      %p161 = por %p159, %p160
      %p162 = scmp.ne.s32.totalorder %s151, %s152
      %p163 = scmp.eq.s32.totalorder %s26, 0
      %p164 = por %p162, %p163
      %p165 = scmp.ne.s32.totalorder %s151, %s152
      %p166 = scmp.eq.s32.totalorder %s27, 1
      %p167 = por %p165, %p166
      %p169 = scmp.ne.s32.totalorder %s152, %s168
      %p170 = scmp.eq.s32.totalorder %s27, 0
      %p171 = por %p169, %p170
      %p172 = scmp.le.s32.totalorder 1, %s21
      %p173 = scmp.lt.s32.totalorder %s21, 3
      %p174 = pnand %p172, %p173
      %p175 = pneg %p174
      // Predicated region
      $region9: #{tpu_custom_call.1} parent=5 // pred_check
        _
      $region10: #{tpu_custom_call.1} parent=5 // pred_check_branch
        %177 = sbr.rel (%p174) target = $region12
      $region11: #{tpu_custom_call.1} parent=5 // pred_region
        %s178 = ssub.s32 %s21, 1
        // Predicated region
        $region13: #{tpu_custom_call.1} parent=11 // pred_check
          %p179 = pneg %p68
        $region14: #{tpu_custom_call.1} parent=11 // pred_check_branch
          %181 = sbr.rel (%p179) target = $region16
        $region15: #{tpu_custom_call.1} parent=11 // pred_region
          _
        $region16: #{tpu_custom_call.1} parent=11 // pred_fallthru
          _
        // Predicated region
        $region17: #{tpu_custom_call.1} parent=11 // pred_check
          %p182 = pneg %p89
        $region18: #{tpu_custom_call.1} parent=11 // pred_check_branch
          %184 = sbr.rel (%p182) target = $region20
        $region19: #{tpu_custom_call.1} parent=11 // pred_region
          _
        $region20: #{tpu_custom_call.1} parent=11 // pred_fallthru
          _
        // Predicated region
        $region21: #{tpu_custom_call.1} parent=11 // pred_check
          %p185 = pneg %p110
        $region22: #{tpu_custom_call.1} parent=11 // pred_check_branch
          %187 = sbr.rel (%p185) target = $region24
        $region23: #{tpu_custom_call.1} parent=11 // pred_region
          _
        $region24: #{tpu_custom_call.1} parent=11 // pred_fallthru
          _
      $region12: #{tpu_custom_call.1} parent=5 // pred_fallthru
        _
      %p188 = scmp.lt.s32.totalorder %s21, 2
      // Predicated region
      $region25: #{tpu_custom_call.1} parent=5 // pred_check
        %p189 = pneg %p188
      $region26: #{tpu_custom_call.1} parent=5 // pred_check_branch
        %191 = sbr.rel (%p189) target = $region28
      $region27: #{tpu_custom_call.1} parent=5 // pred_region
        // Predicated region
        $region29: #{tpu_custom_call.1} parent=27 // pred_check
          %p192 = pneg %p41
        $region30: #{tpu_custom_call.1} parent=27 // pred_check_branch
          %194 = sbr.rel (%p192) target = $region32
        $region31: #{tpu_custom_call.1} parent=27 // pred_region
          %p195 = scmp.lt.s32.totalorder %s21, 1
          %s196 = scalar_select %p195, %s21, 1
          %s197 = smul.addr %s196, 8
          %s198 = scalar_lea.vmem %s1, %s197
        $region32: #{tpu_custom_call.1} parent=27 // pred_fallthru
          _
        // Predicated region
        $region33: #{tpu_custom_call.1} parent=27 // pred_check
          %p199 = pneg %p132
        $region34: #{tpu_custom_call.1} parent=27 // pred_check_branch
          %201 = sbr.rel (%p199) target = $region36
        $region35: #{tpu_custom_call.1} parent=27 // pred_region
          %s202 = sld [smem:[#allocation3 + %s21]]
          %p203 = scmp.lt.s32.totalorder %s202, 1
          %s204 = scalar_select %p203, %s202, 1
          %s205 = smul.addr %s204, 4
          %s206 = smul.addr %s205, 2
          %s207 = scalar_lea.vmem %s5, %s206
          %s208 = sld [smem:[#allocation3 + %s21]]
        $region36: #{tpu_custom_call.1} parent=27 // pred_fallthru
          _
      $region28: #{tpu_custom_call.1} parent=5 // pred_fallthru
        _
      %p209 = scmp.le.s32.totalorder 1, %s21
      %p210 = scmp.lt.s32.totalorder %s21, 3
      %p211 = pnand %p209, %p210
      %p212 = pneg %p211
      // Predicated region
      $region37: #{tpu_custom_call.1} parent=5 // pred_check
        _
      $region38: #{tpu_custom_call.1} parent=5 // pred_check_branch
        %214 = sbr.rel (%p211) target = $region40
      $region39: #{tpu_custom_call.1} parent=5 // pred_region
        %s215 = ssub.s32 %s21, 1
        %p216 = scmp.lt.s32.totalorder %s26, 1
        %s217 = scalar_select %p216, %s26, 1
        %s218 = smul.addr %s217, 8
        %s219 = scalar_lea.vmem %s1, %s218
        %p220 = pneg %p47
        %p221 = pneg %p44
        %p222 = pneg %p68
        %p223 = pneg %p65
        %p224 = pneg %p89
        %p225 = pneg %p86
        %p226 = pneg %p110
        %p227 = pneg %p107
        %s228 = sld [smem:[#allocation3 + %s26]]
        %p229 = scmp.lt.s32.totalorder %s228, 1
        %s230 = scalar_select %p229, %s228, 1
        %s231 = smul.addr %s230, 4
        %s232 = smul.addr %s231, 2
        %s233 = scalar_lea.vmem %s5, %s232
        %p234 = pneg %p138
        %p235 = pneg %p135
        %p236 = pneg %p164
        %p237 = pneg %p161
        %s238 = sand.u32 %s151, 1
        %s239 = scalar_lea.sflag [#allocation5], %s238
        %s240 = sand.u32 %s151, 1
        %s241 = smul.addr %s240, 4
        %s242 = scalar_lea.vmem [#allocation4], %s241
        %p243 = scmp.lt.s32.totalorder %s26, 1
        %s244 = scalar_select %p243, %s26, 1
        %s245 = smul.addr %s244, 8
        %s246 = scalar_lea.vmem %s1, %s245
        %s247 = sld [smem:[#allocation3 + %s26]]
        %p248 = scmp.lt.s32.totalorder %s247, 1
        %s249 = scalar_select %p248, %s247, 1
        %s250 = smul.addr %s249, 4
        %s251 = smul.addr %s250, 2
        %s252 = scalar_lea.vmem %s5, %s251
        %s253 = sld [smem:[#allocation3 + %s26]]
        %v255 = vld [vmem:[%s246] sm:$0xff]
        %v256 = vlaneseq
        %v257 = vshrl.u32 %v256, 7
        %v258 = vcvt.s32.f32 %v257
        %v259 = vmul.f32 %v255, 0.5
        %v261 = vrot.slane %v259, 1
        %v263 = vadd.f32 %v255, %v261
        %vm264 = vcmp.ge.f32.partialorder %v263, -1.0
        %vm265 = vcmp.le.f32.partialorder %v263, 8.0
        %vm266 = vmand %vm264, %vm265
        %v267 = vmax.f32 %v263, 0.0
        %v268 = vmin.f32 %v267, 7.0
        %v269 = vfloor.f32 %v268
        %v270 = vsub.f32 %v268, %v269
        %v271 = vsub.f32 1.0, %v270
        %v272 = vsel %vm266, %v271, 0.0
        %v273 = vsel %vm266, %v270, 0.0
        %v274 = vlaneseq
        %v275 = vshrl.u32 %v274, 7
        %v276 = vsub.s32 0, %v275
        %v277 = vrot.slane %v269, %v276
        %vm278 = vcmp.eq.f32.partialorder %v258, %v277
        %v279 = vlaneseq
        %v280 = vshrl.u32 %v279, 7
        %v281 = vsub.s32 0, %v280
        %v282 = vrot.slane %v272, %v281
        %v283 = vsel %vm278, %v282, 0.0
        %v284 = vadd.f32 %v283, 0.0
        %v285 = vadd.f32 %v269, 1.0
        %v286 = vlaneseq
        %v287 = vshrl.u32 %v286, 7
        %v288 = vsub.s32 0, %v287
        %v289 = vrot.slane %v285, %v288
        %vm290 = vcmp.eq.f32.partialorder %v258, %v289
        %v291 = vlaneseq
        %v292 = vshrl.u32 %v291, 7
        %v293 = vsub.s32 0, %v292
        %v294 = vrot.slane %v273, %v293
        %v295 = vsel %vm290, %v294, 0.0
        %v296 = vadd.f32 %v284, %v295
        %v297 = vmul.f32 %v255, 1.5
        %v299 = vrot.slane %v297, 1
        %v301 = vadd.f32 %v255, %v299
        %vm302 = vcmp.ge.f32.partialorder %v301, -1.0
        %vm303 = vcmp.le.f32.partialorder %v301, 8.0
        %vm304 = vmand %vm302, %vm303
        %v305 = vmax.f32 %v301, 0.0
        %v306 = vmin.f32 %v305, 7.0
        %v307 = vfloor.f32 %v306
        %v308 = vsub.f32 %v306, %v307
        %v309 = vsub.f32 1.0, %v308
        %v310 = vsel %vm304, %v309, 0.0
        %v311 = vsel %vm304, %v308, 0.0
        %v312 = vlaneseq
        %v313 = vshrl.u32 %v312, 7
        %v314 = vsub.s32 0, %v313
        %v315 = vrot.slane %v307, %v314
        %vm316 = vcmp.eq.f32.partialorder %v258, %v315
        %v317 = vlaneseq
        %v318 = vshrl.u32 %v317, 7
        %v319 = vsub.s32 0, %v318
        %v320 = vrot.slane %v310, %v319
        %v321 = vsel %vm316, %v320, 0.0
        %v322 = vadd.f32 %v296, %v321
        %v323 = vadd.f32 %v307, 1.0
        %v324 = vlaneseq
        %v325 = vshrl.u32 %v324, 7
        %v326 = vsub.s32 0, %v325
        %v327 = vrot.slane %v323, %v326
        %vm328 = vcmp.eq.f32.partialorder %v258, %v327
        %v329 = vlaneseq
        %v330 = vshrl.u32 %v329, 7
        %v331 = vsub.s32 0, %v330
        %v332 = vrot.slane %v311, %v331
        %v333 = vsel %vm328, %v332, 0.0
        %v334 = vadd.f32 %v322, %v333
        %v335 = vmul.f32 %v334, 0.5
        %v336 = vlaneseq
        %v337 = vshrl.u32 %v336, 7
        %v338 = vsub.s32 2, %v337
        %v339 = vrot.slane %v269, %v338
        %vm340 = vcmp.eq.f32.partialorder %v258, %v339
        %v341 = vlaneseq
        %v342 = vshrl.u32 %v341, 7
        %v343 = vsub.s32 2, %v342
        %v344 = vrot.slane %v272, %v343
        %v345 = vsel %vm340, %v344, 0.0
        %v346 = vadd.f32 %v345, 0.0
        %v347 = vlaneseq
        %v348 = vshrl.u32 %v347, 7
        %v349 = vsub.s32 2, %v348
        %v350 = vrot.slane %v285, %v349
        %vm351 = vcmp.eq.f32.partialorder %v258, %v350
        %v352 = vlaneseq
        %v353 = vshrl.u32 %v352, 7
        %v354 = vsub.s32 2, %v353
        %v355 = vrot.slane %v273, %v354
        %v356 = vsel %vm351, %v355, 0.0
        %v357 = vadd.f32 %v346, %v356
        %v358 = vlaneseq
        %v359 = vshrl.u32 %v358, 7
        %v360 = vsub.s32 2, %v359
        %v361 = vrot.slane %v307, %v360
        %vm362 = vcmp.eq.f32.partialorder %v258, %v361
        %v363 = vlaneseq
        %v364 = vshrl.u32 %v363, 7
        %v365 = vsub.s32 2, %v364
        %v366 = vrot.slane %v310, %v365
        %v367 = vsel %vm362, %v366, 0.0
        %v368 = vadd.f32 %v357, %v367
        %v369 = vlaneseq
        %v370 = vshrl.u32 %v369, 7
        %v371 = vsub.s32 2, %v370
        %v372 = vrot.slane %v323, %v371
        %vm373 = vcmp.eq.f32.partialorder %v258, %v372
        %v374 = vlaneseq
        %v375 = vshrl.u32 %v374, 7
        %v376 = vsub.s32 2, %v375
        %v377 = vrot.slane %v311, %v376
        %v378 = vsel %vm373, %v377, 0.0
        %v379 = vadd.f32 %v368, %v378
        %v380 = vmul.f32 %v379, 0.5
        %v381 = vlaneseq
        %v382 = vshrl.u32 %v381, 7
        %v383 = vsub.s32 4, %v382
        %v384 = vrot.slane %v269, %v383
        %vm385 = vcmp.eq.f32.partialorder %v258, %v384
        %v386 = vlaneseq
        %v387 = vshrl.u32 %v386, 7
        %v388 = vsub.s32 4, %v387
        %v389 = vrot.slane %v272, %v388
        %v390 = vsel %vm385, %v389, 0.0
        %v391 = vadd.f32 %v390, 0.0
        %v392 = vlaneseq
        %v393 = vshrl.u32 %v392, 7
        %v394 = vsub.s32 4, %v393
        %v395 = vrot.slane %v285, %v394
        %vm396 = vcmp.eq.f32.partialorder %v258, %v395
        %v397 = vlaneseq
        %v398 = vshrl.u32 %v397, 7
        %v399 = vsub.s32 4, %v398
        %v400 = vrot.slane %v273, %v399
        %v401 = vsel %vm396, %v400, 0.0
        %v402 = vadd.f32 %v391, %v401
        %v403 = vlaneseq
        %v404 = vshrl.u32 %v403, 7
        %v405 = vsub.s32 4, %v404
        %v406 = vrot.slane %v307, %v405
        %vm407 = vcmp.eq.f32.partialorder %v258, %v406
        %v408 = vlaneseq
        %v409 = vshrl.u32 %v408, 7
        %v410 = vsub.s32 4, %v409
        %v411 = vrot.slane %v310, %v410
        %v412 = vsel %vm407, %v411, 0.0
        %v413 = vadd.f32 %v402, %v412
        %v414 = vlaneseq
        %v415 = vshrl.u32 %v414, 7
        %v416 = vsub.s32 4, %v415
        %v417 = vrot.slane %v323, %v416
        %vm418 = vcmp.eq.f32.partialorder %v258, %v417
        %v419 = vlaneseq
        %v420 = vshrl.u32 %v419, 7
        %v421 = vsub.s32 4, %v420
        %v422 = vrot.slane %v311, %v421
        %v423 = vsel %vm418, %v422, 0.0
        %v424 = vadd.f32 %v413, %v423
        %v425 = vmul.f32 %v424, 0.5
        %v426 = vld [vmem:[%s2] sm:$0xff]
        %v427 = vld [vmem:[%s2 + $0x8] sm:$0xff]
        %v428 = vld [vmem:[%s2 + $0x10] sm:$0xff]
        %v429 = vld [vmem:[%s2 + $0x18] sm:$0xff]
        %v430 = vld [vmem:[%s2 + $0x20] sm:$0xff]
        %v431 = vld [vmem:[%s2 + $0x28] sm:$0xff]
        %v432 = vld [vmem:[%s2 + $0x30] sm:$0xff]
        %v433 = vld [vmem:[%s2 + $0x38] sm:$0xff]
        %v434 = vld [vmem:[%s2 + $0x40] sm:$0xff]
        %v435 = vld [vmem:[%s2 + $0x48] sm:$0xff]
        %v436 = vld [vmem:[%s2 + $0x50] sm:$0xff]
        %v437 = vld [vmem:[%s2 + $0x58] sm:$0xff]
        %v438 = vld [vmem:[%s2 + $0x60] sm:$0xff]
        %v439 = vld [vmem:[%s2 + $0x68] sm:$0xff]
        %v440 = vld [vmem:[%s2 + $0x70] sm:$0xff]
        %v441 = vld [vmem:[%s2 + $0x78] sm:$0xff]
        %v442 = vld [vmem:[%s2 + $0x80] sm:$0xff]
        %v443 = vld [vmem:[%s2 + $0x88] sm:$0xff]
        %v444 = vld [vmem:[%s2 + $0x90] sm:$0xff]
        %v445 = vld [vmem:[%s2 + $0x98] sm:$0xff]
        %v446 = vld [vmem:[%s2 + $0xa0] sm:$0xff]
        %v447 = vld [vmem:[%s2 + $0xa8] sm:$0xff]
        %v448 = vld [vmem:[%s2 + $0xb0] sm:$0xff]
        %v449 = vld [vmem:[%s2 + $0xb8] sm:$0xff]
        %v450 = vld [vmem:[%s2 + $0xc0] sm:$0xff]
        %v451 = vld [vmem:[%s2 + $0xc8] sm:$0xff]
        %v452 = vld [vmem:[%s2 + $0xd0] sm:$0xff]
        %v453 = vld [vmem:[%s2 + $0xd8] sm:$0xff]
        %v454 = vld [vmem:[%s2 + $0xe0] sm:$0xff]
        %v455 = vld [vmem:[%s2 + $0xe8] sm:$0xff]
        %v456 = vld [vmem:[%s2 + $0xf0] sm:$0xff]
        %v457 = vld [vmem:[%s2 + $0xf8] sm:$0xff]
        %v458 = vld [vmem:[%s2 + $0x100] sm:$0xff]
        %v459 = vld [vmem:[%s2 + $0x108] sm:$0xff]
        %v460 = vld [vmem:[%s2 + $0x110] sm:$0xff]
        %v461 = vld [vmem:[%s2 + $0x118] sm:$0xff]
        %v462 = vld [vmem:[%s2 + $0x120] sm:$0xff]
        %v463 = vld [vmem:[%s2 + $0x128] sm:$0xff]
        %v464 = vld [vmem:[%s2 + $0x130] sm:$0xff]
        %v465 = vld [vmem:[%s2 + $0x138] sm:$0xff]
        %v466 = vld [vmem:[%s2 + $0x140] sm:$0xff]
        %v467 = vld [vmem:[%s2 + $0x148] sm:$0xff]
        %v468 = vld [vmem:[%s2 + $0x150] sm:$0xff]
        %v469 = vld [vmem:[%s2 + $0x158] sm:$0xff]
        %v470 = vld [vmem:[%s2 + $0x160] sm:$0xff]
        %v471 = vld [vmem:[%s2 + $0x168] sm:$0xff]
        %v472 = vld [vmem:[%s2 + $0x170] sm:$0xff]
        %v473 = vld [vmem:[%s2 + $0x178] sm:$0xff]
        %v474 = vld [vmem:[%s2 + $0x180] sm:$0xff]
        %v475 = vld [vmem:[%s2 + $0x188] sm:$0xff]
        %v476 = vld [vmem:[%s2 + $0x190] sm:$0xff]
        %v477 = vld [vmem:[%s2 + $0x198] sm:$0xff]
        %v478 = vld [vmem:[%s2 + $0x1a0] sm:$0xff]
        %v479 = vld [vmem:[%s2 + $0x1a8] sm:$0xff]
        %v480 = vld [vmem:[%s2 + $0x1b0] sm:$0xff]
        %v481 = vld [vmem:[%s2 + $0x1b8] sm:$0xff]
        %v482 = vld [vmem:[%s2 + $0x1c0] sm:$0xff]
        %v483 = vld [vmem:[%s2 + $0x1c8] sm:$0xff]
        %v484 = vld [vmem:[%s2 + $0x1d0] sm:$0xff]
        %v485 = vld [vmem:[%s2 + $0x1d8] sm:$0xff]
        %v486 = vld [vmem:[%s2 + $0x1e0] sm:$0xff]
        %v487 = vld [vmem:[%s2 + $0x1e8] sm:$0xff]
        %v488 = vld [vmem:[%s2 + $0x1f0] sm:$0xff]
        %v489 = vld [vmem:[%s2 + $0x1f8] sm:$0xff]
        %vm490 = vcmask 64512
        %v492 = vsel %vm490, %v426, 0
        %v495 = vsel %vm490, %v427, 0
        %v498 = vsel %vm490, %v428, 0
        %v501 = vsel %vm490, %v429, 0
        %v504 = vsel %vm490, %v430, 0
        %v507 = vsel %vm490, %v431, 0
        %v510 = vsel %vm490, %v432, 0
        %v513 = vsel %vm490, %v433, 0
        %v516 = vsel %vm490, %v434, 0
        %v519 = vsel %vm490, %v435, 0
        %v522 = vsel %vm490, %v436, 0
        %v525 = vsel %vm490, %v437, 0
        %v528 = vsel %vm490, %v438, 0
        %v531 = vsel %vm490, %v439, 0
        %v534 = vsel %vm490, %v440, 0
        %v537 = vsel %vm490, %v441, 0
        %v540 = vsel %vm490, %v442, 0
        %v543 = vsel %vm490, %v443, 0
        %v546 = vsel %vm490, %v444, 0
        %v549 = vsel %vm490, %v445, 0
        %v552 = vsel %vm490, %v446, 0
        %v555 = vsel %vm490, %v447, 0
        %v558 = vsel %vm490, %v448, 0
        %v561 = vsel %vm490, %v449, 0
        %v564 = vsel %vm490, %v450, 0
        %v567 = vsel %vm490, %v451, 0
        %v570 = vsel %vm490, %v452, 0
        %v573 = vsel %vm490, %v453, 0
        %v576 = vsel %vm490, %v454, 0
        %v579 = vsel %vm490, %v455, 0
        %v582 = vsel %vm490, %v456, 0
        %v585 = vsel %vm490, %v457, 0
        %v588 = vsel %vm490, %v458, 0
        %v591 = vsel %vm490, %v459, 0
        %v594 = vsel %vm490, %v460, 0
        %v597 = vsel %vm490, %v461, 0
        %v600 = vsel %vm490, %v462, 0
        %v603 = vsel %vm490, %v463, 0
        %v606 = vsel %vm490, %v464, 0
        %v609 = vsel %vm490, %v465, 0
        %v612 = vsel %vm490, %v466, 0
        %v615 = vsel %vm490, %v467, 0
        %v618 = vsel %vm490, %v468, 0
        %v621 = vsel %vm490, %v469, 0
        %v624 = vsel %vm490, %v470, 0
        %v627 = vsel %vm490, %v471, 0
        %v630 = vsel %vm490, %v472, 0
        %v633 = vsel %vm490, %v473, 0
        %v636 = vsel %vm490, %v474, 0
        %v639 = vsel %vm490, %v475, 0
        %v642 = vsel %vm490, %v476, 0
        %v645 = vsel %vm490, %v477, 0
        %v648 = vsel %vm490, %v478, 0
        %v651 = vsel %vm490, %v479, 0
        %v654 = vsel %vm490, %v480, 0
        %v657 = vsel %vm490, %v481, 0
        %v660 = vsel %vm490, %v482, 0
        %v663 = vsel %vm490, %v483, 0
        %v666 = vsel %vm490, %v484, 0
        %v669 = vsel %vm490, %v485, 0
        %v672 = vsel %vm490, %v486, 0
        %v675 = vsel %vm490, %v487, 0
        %v678 = vsel %vm490, %v488, 0
        %v681 = vsel %vm490, %v489, 0
        %683 = vmatprep.subr.mxu0 0.0
        %684 = vmatpush1.msra.mxu0 %v335
        %685 = vmatprep.subr.mxu0 0.0
        %686 = vmatpush1.msra.mxu0 0.0
        %687 = vmatprep.subr.mxu0 0.0
        %688 = vmatpush1.msra.mxu0 0.0
        %689 = vmatprep.subr.mxu0 0.0
        %690 = vmatpush1.msra.mxu0 0.0
        %691 = vmatprep.subr.mxu0 0.0
        %692 = vmatpush1.msra.mxu0 0.0
        %693 = vmatprep.subr.mxu0 0.0
        %694 = vmatpush1.msra.mxu0 0.0
        %695 = vmatprep.subr.mxu0 0.0
        %696 = vmatpush1.msra.mxu0 0.0
        %697 = vmatprep.subr.mxu0 0.0
        %698 = vmatpush1.msra.mxu0 0.0
        %699 = vmatprep.subr.mxu0 0.0
        %700 = vmatpush1.msra.mxu0 0.0
        %701 = vmatprep.subr.mxu0 0.0
        %702 = vmatpush1.msra.mxu0 0.0
        %703 = vmatprep.subr.mxu0 0.0
        %704 = vmatpush1.msra.mxu0 0.0
        %705 = vmatprep.subr.mxu0 0.0
        %706 = vmatpush1.msra.mxu0 0.0
        %707 = vmatprep.subr.mxu0 0.0
        %708 = vmatpush1.msra.mxu0 0.0
        %709 = vmatprep.subr.mxu0 0.0
        %710 = vmatpush1.msra.mxu0 0.0
        %711 = vmatprep.subr.mxu0 0.0
        %712 = vmatpush1.msra.mxu0 0.0
        %713 = vmatprep.subr.mxu0 0.0
        %714 = vmatpush1.msra.mxu0 0.0
        %715 = vmatprep.subr.mxu0 0.0
        %716 = vmatpush1.msra.mxu0 0.0
        %717 = vmatprep.subr.mxu0 0.0
        %718 = vmatpush1.msra.mxu0 0.0
        %719 = vmatprep.subr.mxu0 0.0
        %720 = vmatpush1.msra.mxu0 0.0
        %721 = vmatprep.subr.mxu0 0.0
        %722 = vmatpush1.msra.mxu0 0.0
        %723 = vmatprep.subr.mxu0 0.0
        %724 = vmatpush1.msra.mxu0 0.0
        %725 = vmatprep.subr.mxu0 0.0
        %726 = vmatpush1.msra.mxu0 0.0
        %727 = vmatprep.subr.mxu0 0.0
        %728 = vmatpush1.msra.mxu0 0.0
        %729 = vmatprep.subr.mxu0 0.0
        %730 = vmatpush1.msra.mxu0 0.0
        %731 = vmatprep.subr.mxu0 0.0
        %732 = vmatpush1.msra.mxu0 0.0
        %733 = vmatprep.subr.mxu0 0.0
        %734 = vmatpush1.msra.mxu0 0.0
        %735 = vmatprep.subr.mxu0 0.0
        %736 = vmatpush1.msra.mxu0 0.0
        %737 = vmatprep.subr.mxu0 0.0
        %738 = vmatpush1.msra.mxu0 0.0
        %739 = vmatprep.subr.mxu0 0.0
        %740 = vmatpush1.msra.mxu0 0.0
        %741 = vmatprep.subr.mxu0 0.0
        %742 = vmatpush1.msra.mxu0 0.0
        %743 = vmatprep.subr.mxu0 0.0
        %744 = vmatpush1.msra.mxu0 0.0
        %745 = vmatprep.subr.mxu0 0.0
        %746 = vmatpush1.msra.mxu0 0.0
        %747 = vmatprep.mubr.f32.mxu0 0.0
        %748 = vmatmul.mubr.f32.gmra.mrb[0].mxu0 %v492
        %v749 = vpop.f32.mrb[0].mxu0
        %v750 = vadd.f32 0.0, %v749
        %v751 = vpop.f32.mrb[0].mxu0
        %752 = vmatprep.mubr.f32.mxu0 0.0
        %753 = vmatmul.mubr.f32.gmra.mrb[0].mxu0 %v495
        %v754 = vpop.f32.mrb[0].mxu0
        %v755 = vadd.f32 0.0, %v754
        %v756 = vpop.f32.mrb[0].mxu0
        %757 = vmatprep.mubr.f32.mxu0 0.0
        %758 = vmatmul.mubr.f32.gmra.mrb[0].mxu0 %v498
        %v759 = vpop.f32.mrb[0].mxu0
        %v760 = vadd.f32 0.0, %v759
        %v761 = vpop.f32.mrb[0].mxu0
        %762 = vmatprep.mubr.f32.mxu0 0.0
        %763 = vmatmul.mubr.f32.gmra.mrb[0].mxu0 %v501
        %v764 = vpop.f32.mrb[0].mxu0
        %v765 = vadd.f32 0.0, %v764
        %v766 = vpop.f32.mrb[0].mxu0
        %767 = vmatprep.mubr.f32.mxu0 0.0
        %768 = vmatmul.mubr.f32.gmra.mrb[0].mxu0 %v504
        %v769 = vpop.f32.mrb[0].mxu0
        %v770 = vadd.f32 0.0, %v769
        %v771 = vpop.f32.mrb[0].mxu0
        %772 = vmatprep.mubr.f32.mxu0 0.0
        %773 = vmatmul.mubr.f32.gmra.mrb[0].mxu0 %v507
        %v774 = vpop.f32.mrb[0].mxu0
        %v775 = vadd.f32 0.0, %v774
        %v776 = vpop.f32.mrb[0].mxu0
        %777 = vmatprep.mubr.f32.mxu0 0.0
        %778 = vmatmul.mubr.f32.gmra.mrb[0].mxu0 %v510
        %v779 = vpop.f32.mrb[0].mxu0
        %v780 = vadd.f32 0.0, %v779
        %v781 = vpop.f32.mrb[0].mxu0
        %782 = vmatprep.mubr.f32.mxu0 0.0
        %783 = vmatmul.mubr.f32.gmra.mrb[0].mxu0 %v513
        %v784 = vpop.f32.mrb[0].mxu0
        %v785 = vadd.f32 0.0, %v784
        %v786 = vpop.f32.mrb[0].mxu0
        %787 = vmatprep.mubr.f32.mxu0 0.0
        %788 = vmatmul.mubr.f32.gmra.mrb[0].mxu0 %v516
        %v789 = vpop.f32.mrb[0].mxu0
        %v790 = vadd.f32 0.0, %v789
        %v791 = vpop.f32.mrb[0].mxu0
        %792 = vmatprep.mubr.f32.mxu0 0.0
        %793 = vmatmul.mubr.f32.gmra.mrb[0].mxu0 %v519
        %v794 = vpop.f32.mrb[0].mxu0
        %v795 = vadd.f32 0.0, %v794
        %v796 = vpop.f32.mrb[0].mxu0
        %797 = vmatprep.mubr.f32.mxu0 0.0
        %798 = vmatmul.mubr.f32.gmra.mrb[0].mxu0 %v522
        %v799 = vpop.f32.mrb[0].mxu0
        %v800 = vadd.f32 0.0, %v799
        %v801 = vpop.f32.mrb[0].mxu0
        %802 = vmatprep.mubr.f32.mxu0 0.0
        %803 = vmatmul.mubr.f32.gmra.mrb[0].mxu0 %v525
        %v804 = vpop.f32.mrb[0].mxu0
        %v805 = vadd.f32 0.0, %v804
        %v806 = vpop.f32.mrb[0].mxu0
        %807 = vmatprep.mubr.f32.mxu0 0.0
        %808 = vmatmul.mubr.f32.gmra.mrb[0].mxu0 %v528
        %v809 = vpop.f32.mrb[0].mxu0
        %v810 = vadd.f32 0.0, %v809
        %v811 = vpop.f32.mrb[0].mxu0
        %812 = vmatprep.mubr.f32.mxu0 0.0
        %813 = vmatmul.mubr.f32.gmra.mrb[0].mxu0 %v531
        %v814 = vpop.f32.mrb[0].mxu0
        %v815 = vadd.f32 0.0, %v814
        %v816 = vpop.f32.mrb[0].mxu0
        %817 = vmatprep.mubr.f32.mxu0 0.0
        %818 = vmatmul.mubr.f32.gmra.mrb[0].mxu0 %v534
        %v819 = vpop.f32.mrb[0].mxu0
        %v820 = vadd.f32 0.0, %v819
        %v821 = vpop.f32.mrb[0].mxu0
        %822 = vmatprep.mubr.f32.mxu0 0.0
        %823 = vmatmul.mubr.f32.gmra.mrb[0].mxu0 %v537
        %v824 = vpop.f32.mrb[0].mxu0
        %v825 = vadd.f32 0.0, %v824
        %v826 = vpop.f32.mrb[0].mxu0
        %827 = vmatprep.mubr.f32.mxu0 0.0
        %828 = vmatmul.mubr.f32.gmra.mrb[0].mxu0 %v540
        %v829 = vpop.f32.mrb[0].mxu0
        %v830 = vadd.f32 0.0, %v829
        %v831 = vpop.f32.mrb[0].mxu0
        %832 = vmatprep.mubr.f32.mxu0 0.0
        %833 = vmatmul.mubr.f32.gmra.mrb[0].mxu0 %v543
        %v834 = vpop.f32.mrb[0].mxu0
        %v835 = vadd.f32 0.0, %v834
        %v836 = vpop.f32.mrb[0].mxu0
        %837 = vmatprep.mubr.f32.mxu0 0.0
        %838 = vmatmul.mubr.f32.gmra.mrb[0].mxu0 %v546
        %v839 = vpop.f32.mrb[0].mxu0
        %v840 = vadd.f32 0.0, %v839
        %v841 = vpop.f32.mrb[0].mxu0
        %842 = vmatprep.mubr.f32.mxu0 0.0
        %843 = vmatmul.mubr.f32.gmra.mrb[0].mxu0 %v549
        %v844 = vpop.f32.mrb[0].mxu0
        %v845 = vadd.f32 0.0, %v844
        %v846 = vpop.f32.mrb[0].mxu0
        %847 = vmatprep.mubr.f32.mxu0 0.0
        %848 = vmatmul.mubr.f32.gmra.mrb[0].mxu0 %v552
        %v849 = vpop.f32.mrb[0].mxu0
        %v850 = vadd.f32 0.0, %v849
        %v851 = vpop.f32.mrb[0].mxu0
        %852 = vmatprep.mubr.f32.mxu0 0.0
        %853 = vmatmul.mubr.f32.gmra.mrb[0].mxu0 %v555
        %v854 = vpop.f32.mrb[0].mxu0
        %v855 = vadd.f32 0.0, %v854
        %v856 = vpop.f32.mrb[0].mxu0
        %857 = vmatprep.mubr.f32.mxu0 0.0
        %858 = vmatmul.mubr.f32.gmra.mrb[0].mxu0 %v558
        %v859 = vpop.f32.mrb[0].mxu0
        %v860 = vadd.f32 0.0, %v859
        %v861 = vpop.f32.mrb[0].mxu0
        %862 = vmatprep.mubr.f32.mxu0 0.0
        %863 = vmatmul.mubr.f32.gmra.mrb[0].mxu0 %v561
        %v864 = vpop.f32.mrb[0].mxu0
        %v865 = vadd.f32 0.0, %v864
        %v866 = vpop.f32.mrb[0].mxu0
        %867 = vmatprep.mubr.f32.mxu0 0.0
        %868 = vmatmul.mubr.f32.gmra.mrb[0].mxu0 %v564
        %v869 = vpop.f32.mrb[0].mxu0
        %v870 = vadd.f32 0.0, %v869
        %v871 = vpop.f32.mrb[0].mxu0
        %872 = vmatprep.mubr.f32.mxu0 0.0
        %873 = vmatmul.mubr.f32.gmra.mrb[0].mxu0 %v567
        %v874 = vpop.f32.mrb[0].mxu0
        %v875 = vadd.f32 0.0, %v874
        %v876 = vpop.f32.mrb[0].mxu0
        %877 = vmatprep.mubr.f32.mxu0 0.0
        %878 = vmatmul.mubr.f32.gmra.mrb[0].mxu0 %v570
        %v879 = vpop.f32.mrb[0].mxu0
        %v880 = vadd.f32 0.0, %v879
        %v881 = vpop.f32.mrb[0].mxu0
        %882 = vmatprep.mubr.f32.mxu0 0.0
        %883 = vmatmul.mubr.f32.gmra.mrb[0].mxu0 %v573
        %v884 = vpop.f32.mrb[0].mxu0
        %v885 = vadd.f32 0.0, %v884
        %v886 = vpop.f32.mrb[0].mxu0
        %887 = vmatprep.mubr.f32.mxu0 0.0
        %888 = vmatmul.mubr.f32.gmra.mrb[0].mxu0 %v576
        %v889 = vpop.f32.mrb[0].mxu0
        %v890 = vadd.f32 0.0, %v889
        %v891 = vpop.f32.mrb[0].mxu0
        %892 = vmatprep.mubr.f32.mxu0 0.0
        %893 = vmatmul.mubr.f32.gmra.mrb[0].mxu0 %v579
        %v894 = vpop.f32.mrb[0].mxu0
        %v895 = vadd.f32 0.0, %v894
        %v896 = vpop.f32.mrb[0].mxu0
        %897 = vmatprep.mubr.f32.mxu0 0.0
        %898 = vmatmul.mubr.f32.gmra.mrb[0].mxu0 %v582
        %v899 = vpop.f32.mrb[0].mxu0
        %v900 = vadd.f32 0.0, %v899
        %v901 = vpop.f32.mrb[0].mxu0
        %902 = vmatprep.mubr.f32.mxu0 0.0
        %903 = vmatmul.mubr.f32.gmra.mrb[0].mxu0 %v585
        %v904 = vpop.f32.mrb[0].mxu0
        %v905 = vadd.f32 0.0, %v904
        %v906 = vpop.f32.mrb[0].mxu0
        %907 = vmatprep.mubr.f32.mxu0 0.0
        %908 = vmatmul.mubr.f32.gmra.mrb[0].mxu0 %v588
        %v909 = vpop.f32.mrb[0].mxu0
        %v910 = vadd.f32 0.0, %v909
        %v911 = vpop.f32.mrb[0].mxu0
        %912 = vmatprep.mubr.f32.mxu0 0.0
        %913 = vmatmul.mubr.f32.gmra.mrb[0].mxu0 %v591
        %v914 = vpop.f32.mrb[0].mxu0
        %v915 = vadd.f32 0.0, %v914
        %v916 = vpop.f32.mrb[0].mxu0
        %917 = vmatprep.mubr.f32.mxu0 0.0
        %918 = vmatmul.mubr.f32.gmra.mrb[0].mxu0 %v594
        %v919 = vpop.f32.mrb[0].mxu0
        %v920 = vadd.f32 0.0, %v919
        %v921 = vpop.f32.mrb[0].mxu0
        %922 = vmatprep.mubr.f32.mxu0 0.0
        %923 = vmatmul.mubr.f32.gmra.mrb[0].mxu0 %v597
        %v924 = vpop.f32.mrb[0].mxu0
        %v925 = vadd.f32 0.0, %v924
        %v926 = vpop.f32.mrb[0].mxu0
        %927 = vmatprep.mubr.f32.mxu0 0.0
        %928 = vmatmul.mubr.f32.gmra.mrb[0].mxu0 %v600
        %v929 = vpop.f32.mrb[0].mxu0
        %v930 = vadd.f32 0.0, %v929
        %v931 = vpop.f32.mrb[0].mxu0
        %932 = vmatprep.mubr.f32.mxu0 0.0
        %933 = vmatmul.mubr.f32.gmra.mrb[0].mxu0 %v603
        %v934 = vpop.f32.mrb[0].mxu0
        %v935 = vadd.f32 0.0, %v934
        %v936 = vpop.f32.mrb[0].mxu0
        %937 = vmatprep.mubr.f32.mxu0 0.0
        %938 = vmatmul.mubr.f32.gmra.mrb[0].mxu0 %v606
        %v939 = vpop.f32.mrb[0].mxu0
        %v940 = vadd.f32 0.0, %v939
        %v941 = vpop.f32.mrb[0].mxu0
        %942 = vmatprep.mubr.f32.mxu0 0.0
        %943 = vmatmul.mubr.f32.gmra.mrb[0].mxu0 %v609
        %v944 = vpop.f32.mrb[0].mxu0
        %v945 = vadd.f32 0.0, %v944
        %v946 = vpop.f32.mrb[0].mxu0
        %947 = vmatprep.mubr.f32.mxu0 0.0
        %948 = vmatmul.mubr.f32.gmra.mrb[0].mxu0 %v612
        %v949 = vpop.f32.mrb[0].mxu0
        %v950 = vadd.f32 0.0, %v949
        %v951 = vpop.f32.mrb[0].mxu0
        %952 = vmatprep.mubr.f32.mxu0 0.0
        %953 = vmatmul.mubr.f32.gmra.mrb[0].mxu0 %v615
        %v954 = vpop.f32.mrb[0].mxu0
        %v955 = vadd.f32 0.0, %v954
        %v956 = vpop.f32.mrb[0].mxu0
        %957 = vmatprep.mubr.f32.mxu0 0.0
        %958 = vmatmul.mubr.f32.gmra.mrb[0].mxu0 %v618
        %v959 = vpop.f32.mrb[0].mxu0
        %v960 = vadd.f32 0.0, %v959
        %v961 = vpop.f32.mrb[0].mxu0
        %962 = vmatprep.mubr.f32.mxu0 0.0
        %963 = vmatmul.mubr.f32.gmra.mrb[0].mxu0 %v621
        %v964 = vpop.f32.mrb[0].mxu0
        %v965 = vadd.f32 0.0, %v964
        %v966 = vpop.f32.mrb[0].mxu0
        %967 = vmatprep.mubr.f32.mxu0 0.0
        %968 = vmatmul.mubr.f32.gmra.mrb[0].mxu0 %v624
        %v969 = vpop.f32.mrb[0].mxu0
        %v970 = vadd.f32 0.0, %v969
        %v971 = vpop.f32.mrb[0].mxu0
        %972 = vmatprep.mubr.f32.mxu0 0.0
        %973 = vmatmul.mubr.f32.gmra.mrb[0].mxu0 %v627
        %v974 = vpop.f32.mrb[0].mxu0
        %v975 = vadd.f32 0.0, %v974
        %v976 = vpop.f32.mrb[0].mxu0
        %977 = vmatprep.mubr.f32.mxu0 0.0
        %978 = vmatmul.mubr.f32.gmra.mrb[0].mxu0 %v630
        %v979 = vpop.f32.mrb[0].mxu0
        %v980 = vadd.f32 0.0, %v979
        %v981 = vpop.f32.mrb[0].mxu0
        %982 = vmatprep.mubr.f32.mxu0 0.0
        %983 = vmatmul.mubr.f32.gmra.mrb[0].mxu0 %v633
        %v984 = vpop.f32.mrb[0].mxu0
        %v985 = vadd.f32 0.0, %v984
        %v986 = vpop.f32.mrb[0].mxu0
        %987 = vmatprep.mubr.f32.mxu0 0.0
        %988 = vmatmul.mubr.f32.gmra.mrb[0].mxu0 %v636
        %v989 = vpop.f32.mrb[0].mxu0
        %v990 = vadd.f32 0.0, %v989
        %v991 = vpop.f32.mrb[0].mxu0
        %992 = vmatprep.mubr.f32.mxu0 0.0
        %993 = vmatmul.mubr.f32.gmra.mrb[0].mxu0 %v639
        %v994 = vpop.f32.mrb[0].mxu0
        %v995 = vadd.f32 0.0, %v994
        %v996 = vpop.f32.mrb[0].mxu0
        %997 = vmatprep.mubr.f32.mxu0 0.0
        %998 = vmatmul.mubr.f32.gmra.mrb[0].mxu0 %v642
        %v999 = vpop.f32.mrb[0].mxu0
        %v1000 = vadd.f32 0.0, %v999
        %v1001 = vpop.f32.mrb[0].mxu0
        %1002 = vmatprep.mubr.f32.mxu0 0.0
        %1003 = vmatmul.mubr.f32.gmra.mrb[0].mxu0 %v645
        %v1004 = vpop.f32.mrb[0].mxu0
        %v1005 = vadd.f32 0.0, %v1004
        %v1006 = vpop.f32.mrb[0].mxu0
        %1007 = vmatprep.mubr.f32.mxu0 0.0
        %1008 = vmatmul.mubr.f32.gmra.mrb[0].mxu0 %v648
        %v1009 = vpop.f32.mrb[0].mxu0
        %v1010 = vadd.f32 0.0, %v1009
        %v1011 = vpop.f32.mrb[0].mxu0
        %1012 = vmatprep.mubr.f32.mxu0 0.0
        %1013 = vmatmul.mubr.f32.gmra.mrb[0].mxu0 %v651
        %v1014 = vpop.f32.mrb[0].mxu0
        %v1015 = vadd.f32 0.0, %v1014
        %v1016 = vpop.f32.mrb[0].mxu0
        %1017 = vmatprep.mubr.f32.mxu0 0.0
        %1018 = vmatmul.mubr.f32.gmra.mrb[0].mxu0 %v654
        %v1019 = vpop.f32.mrb[0].mxu0
        %v1020 = vadd.f32 0.0, %v1019
        %v1021 = vpop.f32.mrb[0].mxu0
        %1022 = vmatprep.mubr.f32.mxu0 0.0
        %1023 = vmatmul.mubr.f32.gmra.mrb[0].mxu0 %v657
        %v1024 = vpop.f32.mrb[0].mxu0
        %v1025 = vadd.f32 0.0, %v1024
        %v1026 = vpop.f32.mrb[0].mxu0
        %1027 = vmatprep.mubr.f32.mxu0 0.0
        %1028 = vmatmul.mubr.f32.gmra.mrb[0].mxu0 %v660
        %v1029 = vpop.f32.mrb[0].mxu0
        %v1030 = vadd.f32 0.0, %v1029
        %v1031 = vpop.f32.mrb[0].mxu0
        %1032 = vmatprep.mubr.f32.mxu0 0.0
        %1033 = vmatmul.mubr.f32.gmra.mrb[0].mxu0 %v663
        %v1034 = vpop.f32.mrb[0].mxu0
        %v1035 = vadd.f32 0.0, %v1034
        %v1036 = vpop.f32.mrb[0].mxu0
        %1037 = vmatprep.mubr.f32.mxu0 0.0
        %1038 = vmatmul.mubr.f32.gmra.mrb[0].mxu0 %v666
        %v1039 = vpop.f32.mrb[0].mxu0
        %v1040 = vadd.f32 0.0, %v1039
        %v1041 = vpop.f32.mrb[0].mxu0
        %1042 = vmatprep.mubr.f32.mxu0 0.0
        %1043 = vmatmul.mubr.f32.gmra.mrb[0].mxu0 %v669
        %v1044 = vpop.f32.mrb[0].mxu0
        %v1045 = vadd.f32 0.0, %v1044
        %v1046 = vpop.f32.mrb[0].mxu0
        %1047 = vmatprep.mubr.f32.mxu0 0.0
        %1048 = vmatmul.mubr.f32.gmra.mrb[0].mxu0 %v672
        %v1049 = vpop.f32.mrb[0].mxu0
        %v1050 = vadd.f32 0.0, %v1049
        %v1051 = vpop.f32.mrb[0].mxu0
        %1052 = vmatprep.mubr.f32.mxu0 0.0
        %1053 = vmatmul.mubr.f32.gmra.mrb[0].mxu0 %v675
        %v1054 = vpop.f32.mrb[0].mxu0
        %v1055 = vadd.f32 0.0, %v1054
        %v1056 = vpop.f32.mrb[0].mxu0
        %1057 = vmatprep.mubr.f32.mxu0 0.0
        %1058 = vmatmul.mubr.f32.gmra.mrb[0].mxu0 %v678
        %v1059 = vpop.f32.mrb[0].mxu0
        %v1060 = vadd.f32 0.0, %v1059
        %v1061 = vpop.f32.mrb[0].mxu0
        %1062 = vmatprep.mubr.f32.mxu0 0.0
        %1063 = vmatmul.mubr.f32.gmra.mrb[0].mxu0 %v681
        %v1064 = vpop.f32.mrb[0].mxu0
        %v1065 = vadd.f32 0.0, %v1064
        %v1066 = vpop.f32.mrb[0].mxu0
        %1067 = vdwg.mxu0
        %v1068 = vld [vmem:[%s3] sm:$0xff]
        %v1069 = vld [vmem:[%s3 + $0x8] sm:$0xff]
        %v1070 = vld [vmem:[%s3 + $0x10] sm:$0xff]
        %v1071 = vld [vmem:[%s3 + $0x18] sm:$0xff]
        %v1072 = vld [vmem:[%s3 + $0x20] sm:$0xff]
        %v1073 = vld [vmem:[%s3 + $0x28] sm:$0xff]
        %v1074 = vld [vmem:[%s3 + $0x30] sm:$0xff]
        %v1075 = vld [vmem:[%s3 + $0x38] sm:$0xff]
        %v1076 = vld [vmem:[%s3 + $0x40] sm:$0xff]
        %v1077 = vld [vmem:[%s3 + $0x48] sm:$0xff]
        %v1078 = vld [vmem:[%s3 + $0x50] sm:$0xff]
        %v1079 = vld [vmem:[%s3 + $0x58] sm:$0xff]
        %v1080 = vld [vmem:[%s3 + $0x60] sm:$0xff]
        %v1081 = vld [vmem:[%s3 + $0x68] sm:$0xff]
        %v1082 = vld [vmem:[%s3 + $0x70] sm:$0xff]
        %v1083 = vld [vmem:[%s3 + $0x78] sm:$0xff]
        %v1084 = vld [vmem:[%s3 + $0x80] sm:$0xff]
        %v1085 = vld [vmem:[%s3 + $0x88] sm:$0xff]
        %v1086 = vld [vmem:[%s3 + $0x90] sm:$0xff]
        %v1087 = vld [vmem:[%s3 + $0x98] sm:$0xff]
        %v1088 = vld [vmem:[%s3 + $0xa0] sm:$0xff]
        %v1089 = vld [vmem:[%s3 + $0xa8] sm:$0xff]
        %v1090 = vld [vmem:[%s3 + $0xb0] sm:$0xff]
        %v1091 = vld [vmem:[%s3 + $0xb8] sm:$0xff]
        %v1092 = vld [vmem:[%s3 + $0xc0] sm:$0xff]
        %v1093 = vld [vmem:[%s3 + $0xc8] sm:$0xff]
        %v1094 = vld [vmem:[%s3 + $0xd0] sm:$0xff]
        %v1095 = vld [vmem:[%s3 + $0xd8] sm:$0xff]
        %v1096 = vld [vmem:[%s3 + $0xe0] sm:$0xff]
        %v1097 = vld [vmem:[%s3 + $0xe8] sm:$0xff]
        %v1098 = vld [vmem:[%s3 + $0xf0] sm:$0xff]
        %v1099 = vld [vmem:[%s3 + $0xf8] sm:$0xff]
        %v1100 = vld [vmem:[%s3 + $0x100] sm:$0xff]
        %v1101 = vld [vmem:[%s3 + $0x108] sm:$0xff]
        %v1102 = vld [vmem:[%s3 + $0x110] sm:$0xff]
        %v1103 = vld [vmem:[%s3 + $0x118] sm:$0xff]
        %v1104 = vld [vmem:[%s3 + $0x120] sm:$0xff]
        %v1105 = vld [vmem:[%s3 + $0x128] sm:$0xff]
        %v1106 = vld [vmem:[%s3 + $0x130] sm:$0xff]
        %v1107 = vld [vmem:[%s3 + $0x138] sm:$0xff]
        %v1108 = vld [vmem:[%s3 + $0x140] sm:$0xff]
        %v1109 = vld [vmem:[%s3 + $0x148] sm:$0xff]
        %v1110 = vld [vmem:[%s3 + $0x150] sm:$0xff]
        %v1111 = vld [vmem:[%s3 + $0x158] sm:$0xff]
        %v1112 = vld [vmem:[%s3 + $0x160] sm:$0xff]
        %v1113 = vld [vmem:[%s3 + $0x168] sm:$0xff]
        %v1114 = vld [vmem:[%s3 + $0x170] sm:$0xff]
        %v1115 = vld [vmem:[%s3 + $0x178] sm:$0xff]
        %v1116 = vld [vmem:[%s3 + $0x180] sm:$0xff]
        %v1117 = vld [vmem:[%s3 + $0x188] sm:$0xff]
        %v1118 = vld [vmem:[%s3 + $0x190] sm:$0xff]
        %v1119 = vld [vmem:[%s3 + $0x198] sm:$0xff]
        %v1120 = vld [vmem:[%s3 + $0x1a0] sm:$0xff]
        %v1121 = vld [vmem:[%s3 + $0x1a8] sm:$0xff]
        %v1122 = vld [vmem:[%s3 + $0x1b0] sm:$0xff]
        %v1123 = vld [vmem:[%s3 + $0x1b8] sm:$0xff]
        %v1124 = vld [vmem:[%s3 + $0x1c0] sm:$0xff]
        %v1125 = vld [vmem:[%s3 + $0x1c8] sm:$0xff]
        %v1126 = vld [vmem:[%s3 + $0x1d0] sm:$0xff]
        %v1127 = vld [vmem:[%s3 + $0x1d8] sm:$0xff]
        %v1128 = vld [vmem:[%s3 + $0x1e0] sm:$0xff]
        %v1129 = vld [vmem:[%s3 + $0x1e8] sm:$0xff]
        %v1130 = vld [vmem:[%s3 + $0x1f0] sm:$0xff]
        %v1131 = vld [vmem:[%s3 + $0x1f8] sm:$0xff]
        %v1133 = vsel %vm490, %v1068, 0
        %v1136 = vsel %vm490, %v1069, 0
        %v1139 = vsel %vm490, %v1070, 0
        %v1142 = vsel %vm490, %v1071, 0
        %v1145 = vsel %vm490, %v1072, 0
        %v1148 = vsel %vm490, %v1073, 0
        %v1151 = vsel %vm490, %v1074, 0
        %v1154 = vsel %vm490, %v1075, 0
        %v1157 = vsel %vm490, %v1076, 0
        %v1160 = vsel %vm490, %v1077, 0
        %v1163 = vsel %vm490, %v1078, 0
        %v1166 = vsel %vm490, %v1079, 0
        %v1169 = vsel %vm490, %v1080, 0
        %v1172 = vsel %vm490, %v1081, 0
        %v1175 = vsel %vm490, %v1082, 0
        %v1178 = vsel %vm490, %v1083, 0
        %v1181 = vsel %vm490, %v1084, 0
        %v1184 = vsel %vm490, %v1085, 0
        %v1187 = vsel %vm490, %v1086, 0
        %v1190 = vsel %vm490, %v1087, 0
        %v1193 = vsel %vm490, %v1088, 0
        %v1196 = vsel %vm490, %v1089, 0
        %v1199 = vsel %vm490, %v1090, 0
        %v1202 = vsel %vm490, %v1091, 0
        %v1205 = vsel %vm490, %v1092, 0
        %v1208 = vsel %vm490, %v1093, 0
        %v1211 = vsel %vm490, %v1094, 0
        %v1214 = vsel %vm490, %v1095, 0
        %v1217 = vsel %vm490, %v1096, 0
        %v1220 = vsel %vm490, %v1097, 0
        %v1223 = vsel %vm490, %v1098, 0
        %v1226 = vsel %vm490, %v1099, 0
        %v1229 = vsel %vm490, %v1100, 0
        %v1232 = vsel %vm490, %v1101, 0
        %v1235 = vsel %vm490, %v1102, 0
        %v1238 = vsel %vm490, %v1103, 0
        %v1241 = vsel %vm490, %v1104, 0
        %v1244 = vsel %vm490, %v1105, 0
        %v1247 = vsel %vm490, %v1106, 0
        %v1250 = vsel %vm490, %v1107, 0
        %v1253 = vsel %vm490, %v1108, 0
        %v1256 = vsel %vm490, %v1109, 0
        %v1259 = vsel %vm490, %v1110, 0
        %v1262 = vsel %vm490, %v1111, 0
        %v1265 = vsel %vm490, %v1112, 0
        %v1268 = vsel %vm490, %v1113, 0
        %v1271 = vsel %vm490, %v1114, 0
        %v1274 = vsel %vm490, %v1115, 0
        %v1277 = vsel %vm490, %v1116, 0
        %v1280 = vsel %vm490, %v1117, 0
        %v1283 = vsel %vm490, %v1118, 0
        %v1286 = vsel %vm490, %v1119, 0
        %v1289 = vsel %vm490, %v1120, 0
        %v1292 = vsel %vm490, %v1121, 0
        %v1295 = vsel %vm490, %v1122, 0
        %v1298 = vsel %vm490, %v1123, 0
        %v1301 = vsel %vm490, %v1124, 0
        %v1304 = vsel %vm490, %v1125, 0
        %v1307 = vsel %vm490, %v1126, 0
        %v1310 = vsel %vm490, %v1127, 0
        %v1313 = vsel %vm490, %v1128, 0
        %v1316 = vsel %vm490, %v1129, 0
        %v1319 = vsel %vm490, %v1130, 0
        %v1322 = vsel %vm490, %v1131, 0
        %1324 = vmatprep.subr.mxu0 0.0
        %1325 = vmatpush1.msra.mxu0 %v380
        %1326 = vmatprep.subr.mxu0 0.0
        %1327 = vmatpush1.msra.mxu0 0.0
        %1328 = vmatprep.subr.mxu0 0.0
        %1329 = vmatpush1.msra.mxu0 0.0
        %1330 = vmatprep.subr.mxu0 0.0
        %1331 = vmatpush1.msra.mxu0 0.0
        %1332 = vmatprep.subr.mxu0 0.0
        %1333 = vmatpush1.msra.mxu0 0.0
        %1334 = vmatprep.subr.mxu0 0.0
        %1335 = vmatpush1.msra.mxu0 0.0
        %1336 = vmatprep.subr.mxu0 0.0
        %1337 = vmatpush1.msra.mxu0 0.0
        %1338 = vmatprep.subr.mxu0 0.0
        %1339 = vmatpush1.msra.mxu0 0.0
        %1340 = vmatprep.subr.mxu0 0.0
        %1341 = vmatpush1.msra.mxu0 0.0
        %1342 = vmatprep.subr.mxu0 0.0
        %1343 = vmatpush1.msra.mxu0 0.0
        %1344 = vmatprep.subr.mxu0 0.0
        %1345 = vmatpush1.msra.mxu0 0.0
        %1346 = vmatprep.subr.mxu0 0.0
        %1347 = vmatpush1.msra.mxu0 0.0
        %1348 = vmatprep.subr.mxu0 0.0
        %1349 = vmatpush1.msra.mxu0 0.0
        %1350 = vmatprep.subr.mxu0 0.0
        %1351 = vmatpush1.msra.mxu0 0.0
        %1352 = vmatprep.subr.mxu0 0.0
        %1353 = vmatpush1.msra.mxu0 0.0
        %1354 = vmatprep.subr.mxu0 0.0
        %1355 = vmatpush1.msra.mxu0 0.0
        %1356 = vmatprep.subr.mxu0 0.0
        %1357 = vmatpush1.msra.mxu0 0.0
        %1358 = vmatprep.subr.mxu0 0.0
        %1359 = vmatpush1.msra.mxu0 0.0
        %1360 = vmatprep.subr.mxu0 0.0
        %1361 = vmatpush1.msra.mxu0 0.0
        %1362 = vmatprep.subr.mxu0 0.0
        %1363 = vmatpush1.msra.mxu0 0.0
        %1364 = vmatprep.subr.mxu0 0.0
        %1365 = vmatpush1.msra.mxu0 0.0
        %1366 = vmatprep.subr.mxu0 0.0
        %1367 = vmatpush1.msra.mxu0 0.0
        %1368 = vmatprep.subr.mxu0 0.0
        %1369 = vmatpush1.msra.mxu0 0.0
        %1370 = vmatprep.subr.mxu0 0.0
        %1371 = vmatpush1.msra.mxu0 0.0
        %1372 = vmatprep.subr.mxu0 0.0
        %1373 = vmatpush1.msra.mxu0 0.0
        %1374 = vmatprep.subr.mxu0 0.0
        %1375 = vmatpush1.msra.mxu0 0.0
        %1376 = vmatprep.subr.mxu0 0.0
        %1377 = vmatpush1.msra.mxu0 0.0
        %1378 = vmatprep.subr.mxu0 0.0
        %1379 = vmatpush1.msra.mxu0 0.0
        %1380 = vmatprep.subr.mxu0 0.0
        %1381 = vmatpush1.msra.mxu0 0.0
        %1382 = vmatprep.subr.mxu0 0.0
        %1383 = vmatpush1.msra.mxu0 0.0
        %1384 = vmatprep.subr.mxu0 0.0
        %1385 = vmatpush1.msra.mxu0 0.0
        %1386 = vmatprep.subr.mxu0 0.0
        %1387 = vmatpush1.msra.mxu0 0.0
        %1388 = vmatprep.mubr.f32.mxu0 0.0
        %1389 = vmatmul.mubr.f32.gmra.mrb[0].mxu0 %v1133
        %v1390 = vpop.f32.mrb[0].mxu0
        %v1391 = vadd.f32 0.0, %v1390
        %v1392 = vpop.f32.mrb[0].mxu0
        %1393 = vmatprep.mubr.f32.mxu0 0.0
        %1394 = vmatmul.mubr.f32.gmra.mrb[0].mxu0 %v1136
        %v1395 = vpop.f32.mrb[0].mxu0
        %v1396 = vadd.f32 0.0, %v1395
        %v1397 = vpop.f32.mrb[0].mxu0
        %1398 = vmatprep.mubr.f32.mxu0 0.0
        %1399 = vmatmul.mubr.f32.gmra.mrb[0].mxu0 %v1139
        %v1400 = vpop.f32.mrb[0].mxu0
        %v1401 = vadd.f32 0.0, %v1400
        %v1402 = vpop.f32.mrb[0].mxu0
        %1403 = vmatprep.mubr.f32.mxu0 0.0
        %1404 = vmatmul.mubr.f32.gmra.mrb[0].mxu0 %v1142
        %v1405 = vpop.f32.mrb[0].mxu0
        %v1406 = vadd.f32 0.0, %v1405
        %v1407 = vpop.f32.mrb[0].mxu0
        %1408 = vmatprep.mubr.f32.mxu0 0.0
        %1409 = vmatmul.mubr.f32.gmra.mrb[0].mxu0 %v1145
        %v1410 = vpop.f32.mrb[0].mxu0
        %v1411 = vadd.f32 0.0, %v1410
        %v1412 = vpop.f32.mrb[0].mxu0
        %1413 = vmatprep.mubr.f32.mxu0 0.0
        %1414 = vmatmul.mubr.f32.gmra.mrb[0].mxu0 %v1148
        %v1415 = vpop.f32.mrb[0].mxu0
        %v1416 = vadd.f32 0.0, %v1415
        %v1417 = vpop.f32.mrb[0].mxu0
        %1418 = vmatprep.mubr.f32.mxu0 0.0
        %1419 = vmatmul.mubr.f32.gmra.mrb[0].mxu0 %v1151
        %v1420 = vpop.f32.mrb[0].mxu0
        %v1421 = vadd.f32 0.0, %v1420
        %v1422 = vpop.f32.mrb[0].mxu0
        %1423 = vmatprep.mubr.f32.mxu0 0.0
        %1424 = vmatmul.mubr.f32.gmra.mrb[0].mxu0 %v1154
        %v1425 = vpop.f32.mrb[0].mxu0
        %v1426 = vadd.f32 0.0, %v1425
        %v1427 = vpop.f32.mrb[0].mxu0
        %1428 = vmatprep.mubr.f32.mxu0 0.0
        %1429 = vmatmul.mubr.f32.gmra.mrb[0].mxu0 %v1157
        %v1430 = vpop.f32.mrb[0].mxu0
        %v1431 = vadd.f32 0.0, %v1430
        %v1432 = vpop.f32.mrb[0].mxu0
        %1433 = vmatprep.mubr.f32.mxu0 0.0
        %1434 = vmatmul.mubr.f32.gmra.mrb[0].mxu0 %v1160
        %v1435 = vpop.f32.mrb[0].mxu0
        %v1436 = vadd.f32 0.0, %v1435
        %v1437 = vpop.f32.mrb[0].mxu0
        %1438 = vmatprep.mubr.f32.mxu0 0.0
        %1439 = vmatmul.mubr.f32.gmra.mrb[0].mxu0 %v1163
        %v1440 = vpop.f32.mrb[0].mxu0
        %v1441 = vadd.f32 0.0, %v1440
        %v1442 = vpop.f32.mrb[0].mxu0
        %1443 = vmatprep.mubr.f32.mxu0 0.0
        %1444 = vmatmul.mubr.f32.gmra.mrb[0].mxu0 %v1166
        %v1445 = vpop.f32.mrb[0].mxu0
        %v1446 = vadd.f32 0.0, %v1445
        %v1447 = vpop.f32.mrb[0].mxu0
        %1448 = vmatprep.mubr.f32.mxu0 0.0
        %1449 = vmatmul.mubr.f32.gmra.mrb[0].mxu0 %v1169
        %v1450 = vpop.f32.mrb[0].mxu0
        %v1451 = vadd.f32 0.0, %v1450
        %v1452 = vpop.f32.mrb[0].mxu0
        %1453 = vmatprep.mubr.f32.mxu0 0.0
        %1454 = vmatmul.mubr.f32.gmra.mrb[0].mxu0 %v1172
        %v1455 = vpop.f32.mrb[0].mxu0
        %v1456 = vadd.f32 0.0, %v1455
        %v1457 = vpop.f32.mrb[0].mxu0
        %1458 = vmatprep.mubr.f32.mxu0 0.0
        %1459 = vmatmul.mubr.f32.gmra.mrb[0].mxu0 %v1175
        %v1460 = vpop.f32.mrb[0].mxu0
        %v1461 = vadd.f32 0.0, %v1460
        %v1462 = vpop.f32.mrb[0].mxu0
        %1463 = vmatprep.mubr.f32.mxu0 0.0
        %1464 = vmatmul.mubr.f32.gmra.mrb[0].mxu0 %v1178
        %v1465 = vpop.f32.mrb[0].mxu0
        %v1466 = vadd.f32 0.0, %v1465
        %v1467 = vpop.f32.mrb[0].mxu0
        %1468 = vmatprep.mubr.f32.mxu0 0.0
        %1469 = vmatmul.mubr.f32.gmra.mrb[0].mxu0 %v1181
        %v1470 = vpop.f32.mrb[0].mxu0
        %v1471 = vadd.f32 0.0, %v1470
        %v1472 = vpop.f32.mrb[0].mxu0
        %1473 = vmatprep.mubr.f32.mxu0 0.0
        %1474 = vmatmul.mubr.f32.gmra.mrb[0].mxu0 %v1184
        %v1475 = vpop.f32.mrb[0].mxu0
        %v1476 = vadd.f32 0.0, %v1475
        %v1477 = vpop.f32.mrb[0].mxu0
        %1478 = vmatprep.mubr.f32.mxu0 0.0
        %1479 = vmatmul.mubr.f32.gmra.mrb[0].mxu0 %v1187
        %v1480 = vpop.f32.mrb[0].mxu0
        %v1481 = vadd.f32 0.0, %v1480
        %v1482 = vpop.f32.mrb[0].mxu0
        %1483 = vmatprep.mubr.f32.mxu0 0.0
        %1484 = vmatmul.mubr.f32.gmra.mrb[0].mxu0 %v1190
        %v1485 = vpop.f32.mrb[0].mxu0
        %v1486 = vadd.f32 0.0, %v1485
        %v1487 = vpop.f32.mrb[0].mxu0
        %1488 = vmatprep.mubr.f32.mxu0 0.0
        %1489 = vmatmul.mubr.f32.gmra.mrb[0].mxu0 %v1193
        %v1490 = vpop.f32.mrb[0].mxu0
        %v1491 = vadd.f32 0.0, %v1490
        %v1492 = vpop.f32.mrb[0].mxu0
        %1493 = vmatprep.mubr.f32.mxu0 0.0
        %1494 = vmatmul.mubr.f32.gmra.mrb[0].mxu0 %v1196
        %v1495 = vpop.f32.mrb[0].mxu0
        %v1496 = vadd.f32 0.0, %v1495
        %v1497 = vpop.f32.mrb[0].mxu0
        %1498 = vmatprep.mubr.f32.mxu0 0.0
        %1499 = vmatmul.mubr.f32.gmra.mrb[0].mxu0 %v1199
        %v1500 = vpop.f32.mrb[0].mxu0
        %v1501 = vadd.f32 0.0, %v1500
        %v1502 = vpop.f32.mrb[0].mxu0
        %1503 = vmatprep.mubr.f32.mxu0 0.0
        %1504 = vmatmul.mubr.f32.gmra.mrb[0].mxu0 %v1202
        %v1505 = vpop.f32.mrb[0].mxu0
        %v1506 = vadd.f32 0.0, %v1505
        %v1507 = vpop.f32.mrb[0].mxu0
        %1508 = vmatprep.mubr.f32.mxu0 0.0
        %1509 = vmatmul.mubr.f32.gmra.mrb[0].mxu0 %v1205
        %v1510 = vpop.f32.mrb[0].mxu0
        %v1511 = vadd.f32 0.0, %v1510
        %v1512 = vpop.f32.mrb[0].mxu0
        %1513 = vmatprep.mubr.f32.mxu0 0.0
        %1514 = vmatmul.mubr.f32.gmra.mrb[0].mxu0 %v1208
        %v1515 = vpop.f32.mrb[0].mxu0
        %v1516 = vadd.f32 0.0, %v1515
        %v1517 = vpop.f32.mrb[0].mxu0
        %1518 = vmatprep.mubr.f32.mxu0 0.0
        %1519 = vmatmul.mubr.f32.gmra.mrb[0].mxu0 %v1211
        %v1520 = vpop.f32.mrb[0].mxu0
        %v1521 = vadd.f32 0.0, %v1520
        %v1522 = vpop.f32.mrb[0].mxu0
        %1523 = vmatprep.mubr.f32.mxu0 0.0
        %1524 = vmatmul.mubr.f32.gmra.mrb[0].mxu0 %v1214
        %v1525 = vpop.f32.mrb[0].mxu0
        %v1526 = vadd.f32 0.0, %v1525
        %v1527 = vpop.f32.mrb[0].mxu0
        %1528 = vmatprep.mubr.f32.mxu0 0.0
        %1529 = vmatmul.mubr.f32.gmra.mrb[0].mxu0 %v1217
        %v1530 = vpop.f32.mrb[0].mxu0
        %v1531 = vadd.f32 0.0, %v1530
        %v1532 = vpop.f32.mrb[0].mxu0
        %1533 = vmatprep.mubr.f32.mxu0 0.0
        %1534 = vmatmul.mubr.f32.gmra.mrb[0].mxu0 %v1220
        %v1535 = vpop.f32.mrb[0].mxu0
        %v1536 = vadd.f32 0.0, %v1535
        %v1537 = vpop.f32.mrb[0].mxu0
        %1538 = vmatprep.mubr.f32.mxu0 0.0
        %1539 = vmatmul.mubr.f32.gmra.mrb[0].mxu0 %v1223
        %v1540 = vpop.f32.mrb[0].mxu0
        %v1541 = vadd.f32 0.0, %v1540
        %v1542 = vpop.f32.mrb[0].mxu0
        %1543 = vmatprep.mubr.f32.mxu0 0.0
        %1544 = vmatmul.mubr.f32.gmra.mrb[0].mxu0 %v1226
        %v1545 = vpop.f32.mrb[0].mxu0
        %v1546 = vadd.f32 0.0, %v1545
        %v1547 = vpop.f32.mrb[0].mxu0
        %1548 = vmatprep.mubr.f32.mxu0 0.0
        %1549 = vmatmul.mubr.f32.gmra.mrb[0].mxu0 %v1229
        %v1550 = vpop.f32.mrb[0].mxu0
        %v1551 = vadd.f32 0.0, %v1550
        %v1552 = vpop.f32.mrb[0].mxu0
        %1553 = vmatprep.mubr.f32.mxu0 0.0
        %1554 = vmatmul.mubr.f32.gmra.mrb[0].mxu0 %v1232
        %v1555 = vpop.f32.mrb[0].mxu0
        %v1556 = vadd.f32 0.0, %v1555
        %v1557 = vpop.f32.mrb[0].mxu0
        %1558 = vmatprep.mubr.f32.mxu0 0.0
        %1559 = vmatmul.mubr.f32.gmra.mrb[0].mxu0 %v1235
        %v1560 = vpop.f32.mrb[0].mxu0
        %v1561 = vadd.f32 0.0, %v1560
        %v1562 = vpop.f32.mrb[0].mxu0
        %1563 = vmatprep.mubr.f32.mxu0 0.0
        %1564 = vmatmul.mubr.f32.gmra.mrb[0].mxu0 %v1238
        %v1565 = vpop.f32.mrb[0].mxu0
        %v1566 = vadd.f32 0.0, %v1565
        %v1567 = vpop.f32.mrb[0].mxu0
        %1568 = vmatprep.mubr.f32.mxu0 0.0
        %1569 = vmatmul.mubr.f32.gmra.mrb[0].mxu0 %v1241
        %v1570 = vpop.f32.mrb[0].mxu0
        %v1571 = vadd.f32 0.0, %v1570
        %v1572 = vpop.f32.mrb[0].mxu0
        %1573 = vmatprep.mubr.f32.mxu0 0.0
        %1574 = vmatmul.mubr.f32.gmra.mrb[0].mxu0 %v1244
        %v1575 = vpop.f32.mrb[0].mxu0
        %v1576 = vadd.f32 0.0, %v1575
        %v1577 = vpop.f32.mrb[0].mxu0
        %1578 = vmatprep.mubr.f32.mxu0 0.0
        %1579 = vmatmul.mubr.f32.gmra.mrb[0].mxu0 %v1247
        %v1580 = vpop.f32.mrb[0].mxu0
        %v1581 = vadd.f32 0.0, %v1580
        %v1582 = vpop.f32.mrb[0].mxu0
        %1583 = vmatprep.mubr.f32.mxu0 0.0
        %1584 = vmatmul.mubr.f32.gmra.mrb[0].mxu0 %v1250
        %v1585 = vpop.f32.mrb[0].mxu0
        %v1586 = vadd.f32 0.0, %v1585
        %v1587 = vpop.f32.mrb[0].mxu0
        %1588 = vmatprep.mubr.f32.mxu0 0.0
        %1589 = vmatmul.mubr.f32.gmra.mrb[0].mxu0 %v1253
        %v1590 = vpop.f32.mrb[0].mxu0
        %v1591 = vadd.f32 0.0, %v1590
        %v1592 = vpop.f32.mrb[0].mxu0
        %1593 = vmatprep.mubr.f32.mxu0 0.0
        %1594 = vmatmul.mubr.f32.gmra.mrb[0].mxu0 %v1256
        %v1595 = vpop.f32.mrb[0].mxu0
        %v1596 = vadd.f32 0.0, %v1595
        %v1597 = vpop.f32.mrb[0].mxu0
        %1598 = vmatprep.mubr.f32.mxu0 0.0
        %1599 = vmatmul.mubr.f32.gmra.mrb[0].mxu0 %v1259
        %v1600 = vpop.f32.mrb[0].mxu0
        %v1601 = vadd.f32 0.0, %v1600
        %v1602 = vpop.f32.mrb[0].mxu0
        %1603 = vmatprep.mubr.f32.mxu0 0.0
        %1604 = vmatmul.mubr.f32.gmra.mrb[0].mxu0 %v1262
        %v1605 = vpop.f32.mrb[0].mxu0
        %v1606 = vadd.f32 0.0, %v1605
        %v1607 = vpop.f32.mrb[0].mxu0
        %1608 = vmatprep.mubr.f32.mxu0 0.0
        %1609 = vmatmul.mubr.f32.gmra.mrb[0].mxu0 %v1265
        %v1610 = vpop.f32.mrb[0].mxu0
        %v1611 = vadd.f32 0.0, %v1610
        %v1612 = vpop.f32.mrb[0].mxu0
        %1613 = vmatprep.mubr.f32.mxu0 0.0
        %1614 = vmatmul.mubr.f32.gmra.mrb[0].mxu0 %v1268
        %v1615 = vpop.f32.mrb[0].mxu0
        %v1616 = vadd.f32 0.0, %v1615
        %v1617 = vpop.f32.mrb[0].mxu0
        %1618 = vmatprep.mubr.f32.mxu0 0.0
        %1619 = vmatmul.mubr.f32.gmra.mrb[0].mxu0 %v1271
        %v1620 = vpop.f32.mrb[0].mxu0
        %v1621 = vadd.f32 0.0, %v1620
        %v1622 = vpop.f32.mrb[0].mxu0
        %1623 = vmatprep.mubr.f32.mxu0 0.0
        %1624 = vmatmul.mubr.f32.gmra.mrb[0].mxu0 %v1274
        %v1625 = vpop.f32.mrb[0].mxu0
        %v1626 = vadd.f32 0.0, %v1625
        %v1627 = vpop.f32.mrb[0].mxu0
        %1628 = vmatprep.mubr.f32.mxu0 0.0
        %1629 = vmatmul.mubr.f32.gmra.mrb[0].mxu0 %v1277
        %v1630 = vpop.f32.mrb[0].mxu0
        %v1631 = vadd.f32 0.0, %v1630
        %v1632 = vpop.f32.mrb[0].mxu0
        %1633 = vmatprep.mubr.f32.mxu0 0.0
        %1634 = vmatmul.mubr.f32.gmra.mrb[0].mxu0 %v1280
        %v1635 = vpop.f32.mrb[0].mxu0
        %v1636 = vadd.f32 0.0, %v1635
        %v1637 = vpop.f32.mrb[0].mxu0
        %1638 = vmatprep.mubr.f32.mxu0 0.0
        %1639 = vmatmul.mubr.f32.gmra.mrb[0].mxu0 %v1283
        %v1640 = vpop.f32.mrb[0].mxu0
        %v1641 = vadd.f32 0.0, %v1640
        %v1642 = vpop.f32.mrb[0].mxu0
        %1643 = vmatprep.mubr.f32.mxu0 0.0
        %1644 = vmatmul.mubr.f32.gmra.mrb[0].mxu0 %v1286
        %v1645 = vpop.f32.mrb[0].mxu0
        %v1646 = vadd.f32 0.0, %v1645
        %v1647 = vpop.f32.mrb[0].mxu0
        %1648 = vmatprep.mubr.f32.mxu0 0.0
        %1649 = vmatmul.mubr.f32.gmra.mrb[0].mxu0 %v1289
        %v1650 = vpop.f32.mrb[0].mxu0
        %v1651 = vadd.f32 0.0, %v1650
        %v1652 = vpop.f32.mrb[0].mxu0
        %1653 = vmatprep.mubr.f32.mxu0 0.0
        %1654 = vmatmul.mubr.f32.gmra.mrb[0].mxu0 %v1292
        %v1655 = vpop.f32.mrb[0].mxu0
        %v1656 = vadd.f32 0.0, %v1655
        %v1657 = vpop.f32.mrb[0].mxu0
        %1658 = vmatprep.mubr.f32.mxu0 0.0
        %1659 = vmatmul.mubr.f32.gmra.mrb[0].mxu0 %v1295
        %v1660 = vpop.f32.mrb[0].mxu0
        %v1661 = vadd.f32 0.0, %v1660
        %v1662 = vpop.f32.mrb[0].mxu0
        %1663 = vmatprep.mubr.f32.mxu0 0.0
        %1664 = vmatmul.mubr.f32.gmra.mrb[0].mxu0 %v1298
        %v1665 = vpop.f32.mrb[0].mxu0
        %v1666 = vadd.f32 0.0, %v1665
        %v1667 = vpop.f32.mrb[0].mxu0
        %1668 = vmatprep.mubr.f32.mxu0 0.0
        %1669 = vmatmul.mubr.f32.gmra.mrb[0].mxu0 %v1301
        %v1670 = vpop.f32.mrb[0].mxu0
        %v1671 = vadd.f32 0.0, %v1670
        %v1672 = vpop.f32.mrb[0].mxu0
        %1673 = vmatprep.mubr.f32.mxu0 0.0
        %1674 = vmatmul.mubr.f32.gmra.mrb[0].mxu0 %v1304
        %v1675 = vpop.f32.mrb[0].mxu0
        %v1676 = vadd.f32 0.0, %v1675
        %v1677 = vpop.f32.mrb[0].mxu0
        %1678 = vmatprep.mubr.f32.mxu0 0.0
        %1679 = vmatmul.mubr.f32.gmra.mrb[0].mxu0 %v1307
        %v1680 = vpop.f32.mrb[0].mxu0
        %v1681 = vadd.f32 0.0, %v1680
        %v1682 = vpop.f32.mrb[0].mxu0
        %1683 = vmatprep.mubr.f32.mxu0 0.0
        %1684 = vmatmul.mubr.f32.gmra.mrb[0].mxu0 %v1310
        %v1685 = vpop.f32.mrb[0].mxu0
        %v1686 = vadd.f32 0.0, %v1685
        %v1687 = vpop.f32.mrb[0].mxu0
        %1688 = vmatprep.mubr.f32.mxu0 0.0
        %1689 = vmatmul.mubr.f32.gmra.mrb[0].mxu0 %v1313
        %v1690 = vpop.f32.mrb[0].mxu0
        %v1691 = vadd.f32 0.0, %v1690
        %v1692 = vpop.f32.mrb[0].mxu0
        %1693 = vmatprep.mubr.f32.mxu0 0.0
        %1694 = vmatmul.mubr.f32.gmra.mrb[0].mxu0 %v1316
        %v1695 = vpop.f32.mrb[0].mxu0
        %v1696 = vadd.f32 0.0, %v1695
        %v1697 = vpop.f32.mrb[0].mxu0
        %1698 = vmatprep.mubr.f32.mxu0 0.0
        %1699 = vmatmul.mubr.f32.gmra.mrb[0].mxu0 %v1319
        %v1700 = vpop.f32.mrb[0].mxu0
        %v1701 = vadd.f32 0.0, %v1700
        %v1702 = vpop.f32.mrb[0].mxu0
        %1703 = vmatprep.mubr.f32.mxu0 0.0
        %1704 = vmatmul.mubr.f32.gmra.mrb[0].mxu0 %v1322
        %v1705 = vpop.f32.mrb[0].mxu0
        %v1706 = vadd.f32 0.0, %v1705
        %v1707 = vpop.f32.mrb[0].mxu0
        %1708 = vdwg.mxu0
        %v1709 = vmul.f32 %v750, %v1391
        %v1710 = vmul.f32 %v755, %v1396
        %v1711 = vmul.f32 %v760, %v1401
        %v1712 = vmul.f32 %v765, %v1406
        %v1713 = vmul.f32 %v770, %v1411
        %v1714 = vmul.f32 %v775, %v1416
        %v1715 = vmul.f32 %v780, %v1421
        %v1716 = vmul.f32 %v785, %v1426
        %v1717 = vmul.f32 %v790, %v1431
        %v1718 = vmul.f32 %v795, %v1436
        %v1719 = vmul.f32 %v800, %v1441
        %v1720 = vmul.f32 %v805, %v1446
        %v1721 = vmul.f32 %v810, %v1451
        %v1722 = vmul.f32 %v815, %v1456
        %v1723 = vmul.f32 %v820, %v1461
        %v1724 = vmul.f32 %v825, %v1466
        %v1725 = vmul.f32 %v830, %v1471
        %v1726 = vmul.f32 %v835, %v1476
        %v1727 = vmul.f32 %v840, %v1481
        %v1728 = vmul.f32 %v845, %v1486
        %v1729 = vmul.f32 %v850, %v1491
        %v1730 = vmul.f32 %v855, %v1496
        %v1731 = vmul.f32 %v860, %v1501
        %v1732 = vmul.f32 %v865, %v1506
        %v1733 = vmul.f32 %v870, %v1511
        %v1734 = vmul.f32 %v875, %v1516
        %v1735 = vmul.f32 %v880, %v1521
        %v1736 = vmul.f32 %v885, %v1526
        %v1737 = vmul.f32 %v890, %v1531
        %v1738 = vmul.f32 %v895, %v1536
        %v1739 = vmul.f32 %v900, %v1541
        %v1740 = vmul.f32 %v905, %v1546
        %v1741 = vmul.f32 %v910, %v1551
        %v1742 = vmul.f32 %v915, %v1556
        %v1743 = vmul.f32 %v920, %v1561
        %v1744 = vmul.f32 %v925, %v1566
        %v1745 = vmul.f32 %v930, %v1571
        %v1746 = vmul.f32 %v935, %v1576
        %v1747 = vmul.f32 %v940, %v1581
        %v1748 = vmul.f32 %v945, %v1586
        %v1749 = vmul.f32 %v950, %v1591
        %v1750 = vmul.f32 %v955, %v1596
        %v1751 = vmul.f32 %v960, %v1601
        %v1752 = vmul.f32 %v965, %v1606
        %v1753 = vmul.f32 %v970, %v1611
        %v1754 = vmul.f32 %v975, %v1616
        %v1755 = vmul.f32 %v980, %v1621
        %v1756 = vmul.f32 %v985, %v1626
        %v1757 = vmul.f32 %v990, %v1631
        %v1758 = vmul.f32 %v995, %v1636
        %v1759 = vmul.f32 %v1000, %v1641
        %v1760 = vmul.f32 %v1005, %v1646
        %v1761 = vmul.f32 %v1010, %v1651
        %v1762 = vmul.f32 %v1015, %v1656
        %v1763 = vmul.f32 %v1020, %v1661
        %v1764 = vmul.f32 %v1025, %v1666
        %v1765 = vmul.f32 %v1030, %v1671
        %v1766 = vmul.f32 %v1035, %v1676
        %v1767 = vmul.f32 %v1040, %v1681
        %v1768 = vmul.f32 %v1045, %v1686
        %v1769 = vmul.f32 %v1050, %v1691
        %v1770 = vmul.f32 %v1055, %v1696
        %v1771 = vmul.f32 %v1060, %v1701
        %v1772 = vmul.f32 %v1065, %v1706
        %v1773 = vld [vmem:[%s4] sm:$0xff]
        %v1774 = vld [vmem:[%s4 + $0x8] sm:$0xff]
        %v1775 = vld [vmem:[%s4 + $0x10] sm:$0xff]
        %v1776 = vld [vmem:[%s4 + $0x18] sm:$0xff]
        %v1777 = vld [vmem:[%s4 + $0x20] sm:$0xff]
        %v1778 = vld [vmem:[%s4 + $0x28] sm:$0xff]
        %v1779 = vld [vmem:[%s4 + $0x30] sm:$0xff]
        %v1780 = vld [vmem:[%s4 + $0x38] sm:$0xff]
        %v1781 = vld [vmem:[%s4 + $0x40] sm:$0xff]
        %v1782 = vld [vmem:[%s4 + $0x48] sm:$0xff]
        %v1783 = vld [vmem:[%s4 + $0x50] sm:$0xff]
        %v1784 = vld [vmem:[%s4 + $0x58] sm:$0xff]
        %v1785 = vld [vmem:[%s4 + $0x60] sm:$0xff]
        %v1786 = vld [vmem:[%s4 + $0x68] sm:$0xff]
        %v1787 = vld [vmem:[%s4 + $0x70] sm:$0xff]
        %v1788 = vld [vmem:[%s4 + $0x78] sm:$0xff]
        %v1789 = vld [vmem:[%s4 + $0x80] sm:$0xff]
        %v1790 = vld [vmem:[%s4 + $0x88] sm:$0xff]
        %v1791 = vld [vmem:[%s4 + $0x90] sm:$0xff]
        %v1792 = vld [vmem:[%s4 + $0x98] sm:$0xff]
        %v1793 = vld [vmem:[%s4 + $0xa0] sm:$0xff]
        %v1794 = vld [vmem:[%s4 + $0xa8] sm:$0xff]
        %v1795 = vld [vmem:[%s4 + $0xb0] sm:$0xff]
        %v1796 = vld [vmem:[%s4 + $0xb8] sm:$0xff]
        %v1797 = vld [vmem:[%s4 + $0xc0] sm:$0xff]
        %v1798 = vld [vmem:[%s4 + $0xc8] sm:$0xff]
        %v1799 = vld [vmem:[%s4 + $0xd0] sm:$0xff]
        %v1800 = vld [vmem:[%s4 + $0xd8] sm:$0xff]
        %v1801 = vld [vmem:[%s4 + $0xe0] sm:$0xff]
        %v1802 = vld [vmem:[%s4 + $0xe8] sm:$0xff]
        %v1803 = vld [vmem:[%s4 + $0xf0] sm:$0xff]
        %v1804 = vld [vmem:[%s4 + $0xf8] sm:$0xff]
        %v1805 = vld [vmem:[%s4 + $0x100] sm:$0xff]
        %v1806 = vld [vmem:[%s4 + $0x108] sm:$0xff]
        %v1807 = vld [vmem:[%s4 + $0x110] sm:$0xff]
        %v1808 = vld [vmem:[%s4 + $0x118] sm:$0xff]
        %v1809 = vld [vmem:[%s4 + $0x120] sm:$0xff]
        %v1810 = vld [vmem:[%s4 + $0x128] sm:$0xff]
        %v1811 = vld [vmem:[%s4 + $0x130] sm:$0xff]
        %v1812 = vld [vmem:[%s4 + $0x138] sm:$0xff]
        %v1813 = vld [vmem:[%s4 + $0x140] sm:$0xff]
        %v1814 = vld [vmem:[%s4 + $0x148] sm:$0xff]
        %v1815 = vld [vmem:[%s4 + $0x150] sm:$0xff]
        %v1816 = vld [vmem:[%s4 + $0x158] sm:$0xff]
        %v1817 = vld [vmem:[%s4 + $0x160] sm:$0xff]
        %v1818 = vld [vmem:[%s4 + $0x168] sm:$0xff]
        %v1819 = vld [vmem:[%s4 + $0x170] sm:$0xff]
        %v1820 = vld [vmem:[%s4 + $0x178] sm:$0xff]
        %v1821 = vld [vmem:[%s4 + $0x180] sm:$0xff]
        %v1822 = vld [vmem:[%s4 + $0x188] sm:$0xff]
        %v1823 = vld [vmem:[%s4 + $0x190] sm:$0xff]
        %v1824 = vld [vmem:[%s4 + $0x198] sm:$0xff]
        %v1825 = vld [vmem:[%s4 + $0x1a0] sm:$0xff]
        %v1826 = vld [vmem:[%s4 + $0x1a8] sm:$0xff]
        %v1827 = vld [vmem:[%s4 + $0x1b0] sm:$0xff]
        %v1828 = vld [vmem:[%s4 + $0x1b8] sm:$0xff]
        %v1829 = vld [vmem:[%s4 + $0x1c0] sm:$0xff]
        %v1830 = vld [vmem:[%s4 + $0x1c8] sm:$0xff]
        %v1831 = vld [vmem:[%s4 + $0x1d0] sm:$0xff]
        %v1832 = vld [vmem:[%s4 + $0x1d8] sm:$0xff]
        %v1833 = vld [vmem:[%s4 + $0x1e0] sm:$0xff]
        %v1834 = vld [vmem:[%s4 + $0x1e8] sm:$0xff]
        %v1835 = vld [vmem:[%s4 + $0x1f0] sm:$0xff]
        %v1836 = vld [vmem:[%s4 + $0x1f8] sm:$0xff]
        %v1838 = vsel %vm490, %v1773, 0
        %v1841 = vsel %vm490, %v1774, 0
        %v1844 = vsel %vm490, %v1775, 0
        %v1847 = vsel %vm490, %v1776, 0
        %v1850 = vsel %vm490, %v1777, 0
        %v1853 = vsel %vm490, %v1778, 0
        %v1856 = vsel %vm490, %v1779, 0
        %v1859 = vsel %vm490, %v1780, 0
        %v1862 = vsel %vm490, %v1781, 0
        %v1865 = vsel %vm490, %v1782, 0
        %v1868 = vsel %vm490, %v1783, 0
        %v1871 = vsel %vm490, %v1784, 0
        %v1874 = vsel %vm490, %v1785, 0
        %v1877 = vsel %vm490, %v1786, 0
        %v1880 = vsel %vm490, %v1787, 0
        %v1883 = vsel %vm490, %v1788, 0
        %v1886 = vsel %vm490, %v1789, 0
        %v1889 = vsel %vm490, %v1790, 0
        %v1892 = vsel %vm490, %v1791, 0
        %v1895 = vsel %vm490, %v1792, 0
        %v1898 = vsel %vm490, %v1793, 0
        %v1901 = vsel %vm490, %v1794, 0
        %v1904 = vsel %vm490, %v1795, 0
        %v1907 = vsel %vm490, %v1796, 0
        %v1910 = vsel %vm490, %v1797, 0
        %v1913 = vsel %vm490, %v1798, 0
        %v1916 = vsel %vm490, %v1799, 0
        %v1919 = vsel %vm490, %v1800, 0
        %v1922 = vsel %vm490, %v1801, 0
        %v1925 = vsel %vm490, %v1802, 0
        %v1928 = vsel %vm490, %v1803, 0
        %v1931 = vsel %vm490, %v1804, 0
        %v1934 = vsel %vm490, %v1805, 0
        %v1937 = vsel %vm490, %v1806, 0
        %v1940 = vsel %vm490, %v1807, 0
        %v1943 = vsel %vm490, %v1808, 0
        %v1946 = vsel %vm490, %v1809, 0
        %v1949 = vsel %vm490, %v1810, 0
        %v1952 = vsel %vm490, %v1811, 0
        %v1955 = vsel %vm490, %v1812, 0
        %v1958 = vsel %vm490, %v1813, 0
        %v1961 = vsel %vm490, %v1814, 0
        %v1964 = vsel %vm490, %v1815, 0
        %v1967 = vsel %vm490, %v1816, 0
        %v1970 = vsel %vm490, %v1817, 0
        %v1973 = vsel %vm490, %v1818, 0
        %v1976 = vsel %vm490, %v1819, 0
        %v1979 = vsel %vm490, %v1820, 0
        %v1982 = vsel %vm490, %v1821, 0
        %v1985 = vsel %vm490, %v1822, 0
        %v1988 = vsel %vm490, %v1823, 0
        %v1991 = vsel %vm490, %v1824, 0
        %v1994 = vsel %vm490, %v1825, 0
        %v1997 = vsel %vm490, %v1826, 0
        %v2000 = vsel %vm490, %v1827, 0
        %v2003 = vsel %vm490, %v1828, 0
        %v2006 = vsel %vm490, %v1829, 0
        %v2009 = vsel %vm490, %v1830, 0
        %v2012 = vsel %vm490, %v1831, 0
        %v2015 = vsel %vm490, %v1832, 0
        %v2018 = vsel %vm490, %v1833, 0
        %v2021 = vsel %vm490, %v1834, 0
        %v2024 = vsel %vm490, %v1835, 0
        %v2027 = vsel %vm490, %v1836, 0
        %2029 = vmatprep.subr.mxu0 0.0
        %2030 = vmatpush1.msra.mxu0 %v425
        %2031 = vmatprep.subr.mxu0 0.0
        %2032 = vmatpush1.msra.mxu0 0.0
        %2033 = vmatprep.subr.mxu0 0.0
        %2034 = vmatpush1.msra.mxu0 0.0
        %2035 = vmatprep.subr.mxu0 0.0
        %2036 = vmatpush1.msra.mxu0 0.0
        %2037 = vmatprep.subr.mxu0 0.0
        %2038 = vmatpush1.msra.mxu0 0.0
        %2039 = vmatprep.subr.mxu0 0.0
        %2040 = vmatpush1.msra.mxu0 0.0
        %2041 = vmatprep.subr.mxu0 0.0
        %2042 = vmatpush1.msra.mxu0 0.0
        %2043 = vmatprep.subr.mxu0 0.0
        %2044 = vmatpush1.msra.mxu0 0.0
        %2045 = vmatprep.subr.mxu0 0.0
        %2046 = vmatpush1.msra.mxu0 0.0
        %2047 = vmatprep.subr.mxu0 0.0
        %2048 = vmatpush1.msra.mxu0 0.0
        %2049 = vmatprep.subr.mxu0 0.0
        %2050 = vmatpush1.msra.mxu0 0.0
        %2051 = vmatprep.subr.mxu0 0.0
        %2052 = vmatpush1.msra.mxu0 0.0
        %2053 = vmatprep.subr.mxu0 0.0
        %2054 = vmatpush1.msra.mxu0 0.0
        %2055 = vmatprep.subr.mxu0 0.0
        %2056 = vmatpush1.msra.mxu0 0.0
        %2057 = vmatprep.subr.mxu0 0.0
        %2058 = vmatpush1.msra.mxu0 0.0
        %2059 = vmatprep.subr.mxu0 0.0
        %2060 = vmatpush1.msra.mxu0 0.0
        %2061 = vmatprep.subr.mxu0 0.0
        %2062 = vmatpush1.msra.mxu0 0.0
        %2063 = vmatprep.subr.mxu0 0.0
        %2064 = vmatpush1.msra.mxu0 0.0
        %2065 = vmatprep.subr.mxu0 0.0
        %2066 = vmatpush1.msra.mxu0 0.0
        %2067 = vmatprep.subr.mxu0 0.0
        %2068 = vmatpush1.msra.mxu0 0.0
        %2069 = vmatprep.subr.mxu0 0.0
        %2070 = vmatpush1.msra.mxu0 0.0
        %2071 = vmatprep.subr.mxu0 0.0
        %2072 = vmatpush1.msra.mxu0 0.0
        %2073 = vmatprep.subr.mxu0 0.0
        %2074 = vmatpush1.msra.mxu0 0.0
        %2075 = vmatprep.subr.mxu0 0.0
        %2076 = vmatpush1.msra.mxu0 0.0
        %2077 = vmatprep.subr.mxu0 0.0
        %2078 = vmatpush1.msra.mxu0 0.0
        %2079 = vmatprep.subr.mxu0 0.0
        %2080 = vmatpush1.msra.mxu0 0.0
        %2081 = vmatprep.subr.mxu0 0.0
        %2082 = vmatpush1.msra.mxu0 0.0
        %2083 = vmatprep.subr.mxu0 0.0
        %2084 = vmatpush1.msra.mxu0 0.0
        %2085 = vmatprep.subr.mxu0 0.0
        %2086 = vmatpush1.msra.mxu0 0.0
        %2087 = vmatprep.subr.mxu0 0.0
        %2088 = vmatpush1.msra.mxu0 0.0
        %2089 = vmatprep.subr.mxu0 0.0
        %2090 = vmatpush1.msra.mxu0 0.0
        %2091 = vmatprep.subr.mxu0 0.0
        %2092 = vmatpush1.msra.mxu0 0.0
        %2093 = vmatprep.mubr.f32.mxu0 0.0
        %2094 = vmatmul.mubr.f32.gmra.mrb[0].mxu0 %v1838
        %v2095 = vpop.f32.mrb[0].mxu0
        %v2096 = vadd.f32 0.0, %v2095
        %v2097 = vpop.f32.mrb[0].mxu0
        %2098 = vmatprep.mubr.f32.mxu0 0.0
        %2099 = vmatmul.mubr.f32.gmra.mrb[0].mxu0 %v1841
        %v2100 = vpop.f32.mrb[0].mxu0
        %v2101 = vadd.f32 0.0, %v2100
        %v2102 = vpop.f32.mrb[0].mxu0
        %2103 = vmatprep.mubr.f32.mxu0 0.0
        %2104 = vmatmul.mubr.f32.gmra.mrb[0].mxu0 %v1844
        %v2105 = vpop.f32.mrb[0].mxu0
        %v2106 = vadd.f32 0.0, %v2105
        %v2107 = vpop.f32.mrb[0].mxu0
        %2108 = vmatprep.mubr.f32.mxu0 0.0
        %2109 = vmatmul.mubr.f32.gmra.mrb[0].mxu0 %v1847
        %v2110 = vpop.f32.mrb[0].mxu0
        %v2111 = vadd.f32 0.0, %v2110
        %v2112 = vpop.f32.mrb[0].mxu0
        %2113 = vmatprep.mubr.f32.mxu0 0.0
        %2114 = vmatmul.mubr.f32.gmra.mrb[0].mxu0 %v1850
        %v2115 = vpop.f32.mrb[0].mxu0
        %v2116 = vadd.f32 0.0, %v2115
        %v2117 = vpop.f32.mrb[0].mxu0
        %2118 = vmatprep.mubr.f32.mxu0 0.0
        %2119 = vmatmul.mubr.f32.gmra.mrb[0].mxu0 %v1853
        %v2120 = vpop.f32.mrb[0].mxu0
        %v2121 = vadd.f32 0.0, %v2120
        %v2122 = vpop.f32.mrb[0].mxu0
        %2123 = vmatprep.mubr.f32.mxu0 0.0
        %2124 = vmatmul.mubr.f32.gmra.mrb[0].mxu0 %v1856
        %v2125 = vpop.f32.mrb[0].mxu0
        %v2126 = vadd.f32 0.0, %v2125
        %v2127 = vpop.f32.mrb[0].mxu0
        %2128 = vmatprep.mubr.f32.mxu0 0.0
        %2129 = vmatmul.mubr.f32.gmra.mrb[0].mxu0 %v1859
        %v2130 = vpop.f32.mrb[0].mxu0
        %v2131 = vadd.f32 0.0, %v2130
        %v2132 = vpop.f32.mrb[0].mxu0
        %2133 = vmatprep.mubr.f32.mxu0 0.0
        %2134 = vmatmul.mubr.f32.gmra.mrb[0].mxu0 %v1862
        %v2135 = vpop.f32.mrb[0].mxu0
        %v2136 = vadd.f32 0.0, %v2135
        %v2137 = vpop.f32.mrb[0].mxu0
        %2138 = vmatprep.mubr.f32.mxu0 0.0
        %2139 = vmatmul.mubr.f32.gmra.mrb[0].mxu0 %v1865
        %v2140 = vpop.f32.mrb[0].mxu0
        %v2141 = vadd.f32 0.0, %v2140
        %v2142 = vpop.f32.mrb[0].mxu0
        %2143 = vmatprep.mubr.f32.mxu0 0.0
        %2144 = vmatmul.mubr.f32.gmra.mrb[0].mxu0 %v1868
        %v2145 = vpop.f32.mrb[0].mxu0
        %v2146 = vadd.f32 0.0, %v2145
        %v2147 = vpop.f32.mrb[0].mxu0
        %2148 = vmatprep.mubr.f32.mxu0 0.0
        %2149 = vmatmul.mubr.f32.gmra.mrb[0].mxu0 %v1871
        %v2150 = vpop.f32.mrb[0].mxu0
        %v2151 = vadd.f32 0.0, %v2150
        %v2152 = vpop.f32.mrb[0].mxu0
        %2153 = vmatprep.mubr.f32.mxu0 0.0
        %2154 = vmatmul.mubr.f32.gmra.mrb[0].mxu0 %v1874
        %v2155 = vpop.f32.mrb[0].mxu0
        %v2156 = vadd.f32 0.0, %v2155
        %v2157 = vpop.f32.mrb[0].mxu0
        %2158 = vmatprep.mubr.f32.mxu0 0.0
        %2159 = vmatmul.mubr.f32.gmra.mrb[0].mxu0 %v1877
        %v2160 = vpop.f32.mrb[0].mxu0
        %v2161 = vadd.f32 0.0, %v2160
        %v2162 = vpop.f32.mrb[0].mxu0
        %2163 = vmatprep.mubr.f32.mxu0 0.0
        %2164 = vmatmul.mubr.f32.gmra.mrb[0].mxu0 %v1880
        %v2165 = vpop.f32.mrb[0].mxu0
        %v2166 = vadd.f32 0.0, %v2165
        %v2167 = vpop.f32.mrb[0].mxu0
        %2168 = vmatprep.mubr.f32.mxu0 0.0
        %2169 = vmatmul.mubr.f32.gmra.mrb[0].mxu0 %v1883
        %v2170 = vpop.f32.mrb[0].mxu0
        %v2171 = vadd.f32 0.0, %v2170
        %v2172 = vpop.f32.mrb[0].mxu0
        %2173 = vmatprep.mubr.f32.mxu0 0.0
        %2174 = vmatmul.mubr.f32.gmra.mrb[0].mxu0 %v1886
        %v2175 = vpop.f32.mrb[0].mxu0
        %v2176 = vadd.f32 0.0, %v2175
        %v2177 = vpop.f32.mrb[0].mxu0
        %2178 = vmatprep.mubr.f32.mxu0 0.0
        %2179 = vmatmul.mubr.f32.gmra.mrb[0].mxu0 %v1889
        %v2180 = vpop.f32.mrb[0].mxu0
        %v2181 = vadd.f32 0.0, %v2180
        %v2182 = vpop.f32.mrb[0].mxu0
        %2183 = vmatprep.mubr.f32.mxu0 0.0
        %2184 = vmatmul.mubr.f32.gmra.mrb[0].mxu0 %v1892
        %v2185 = vpop.f32.mrb[0].mxu0
        %v2186 = vadd.f32 0.0, %v2185
        %v2187 = vpop.f32.mrb[0].mxu0
        %2188 = vmatprep.mubr.f32.mxu0 0.0
        %2189 = vmatmul.mubr.f32.gmra.mrb[0].mxu0 %v1895
        %v2190 = vpop.f32.mrb[0].mxu0
        %v2191 = vadd.f32 0.0, %v2190
        %v2192 = vpop.f32.mrb[0].mxu0
        %2193 = vmatprep.mubr.f32.mxu0 0.0
        %2194 = vmatmul.mubr.f32.gmra.mrb[0].mxu0 %v1898
        %v2195 = vpop.f32.mrb[0].mxu0
        %v2196 = vadd.f32 0.0, %v2195
        %v2197 = vpop.f32.mrb[0].mxu0
        %2198 = vmatprep.mubr.f32.mxu0 0.0
        %2199 = vmatmul.mubr.f32.gmra.mrb[0].mxu0 %v1901
        %v2200 = vpop.f32.mrb[0].mxu0
        %v2201 = vadd.f32 0.0, %v2200
        %v2202 = vpop.f32.mrb[0].mxu0
        %2203 = vmatprep.mubr.f32.mxu0 0.0
        %2204 = vmatmul.mubr.f32.gmra.mrb[0].mxu0 %v1904
        %v2205 = vpop.f32.mrb[0].mxu0
        %v2206 = vadd.f32 0.0, %v2205
        %v2207 = vpop.f32.mrb[0].mxu0
        %2208 = vmatprep.mubr.f32.mxu0 0.0
        %2209 = vmatmul.mubr.f32.gmra.mrb[0].mxu0 %v1907
        %v2210 = vpop.f32.mrb[0].mxu0
        %v2211 = vadd.f32 0.0, %v2210
        %v2212 = vpop.f32.mrb[0].mxu0
        %2213 = vmatprep.mubr.f32.mxu0 0.0
        %2214 = vmatmul.mubr.f32.gmra.mrb[0].mxu0 %v1910
        %v2215 = vpop.f32.mrb[0].mxu0
        %v2216 = vadd.f32 0.0, %v2215
        %v2217 = vpop.f32.mrb[0].mxu0
        %2218 = vmatprep.mubr.f32.mxu0 0.0
        %2219 = vmatmul.mubr.f32.gmra.mrb[0].mxu0 %v1913
        %v2220 = vpop.f32.mrb[0].mxu0
        %v2221 = vadd.f32 0.0, %v2220
        %v2222 = vpop.f32.mrb[0].mxu0
        %2223 = vmatprep.mubr.f32.mxu0 0.0
        %2224 = vmatmul.mubr.f32.gmra.mrb[0].mxu0 %v1916
        %v2225 = vpop.f32.mrb[0].mxu0
        %v2226 = vadd.f32 0.0, %v2225
        %v2227 = vpop.f32.mrb[0].mxu0
        %2228 = vmatprep.mubr.f32.mxu0 0.0
        %2229 = vmatmul.mubr.f32.gmra.mrb[0].mxu0 %v1919
        %v2230 = vpop.f32.mrb[0].mxu0
        %v2231 = vadd.f32 0.0, %v2230
        %v2232 = vpop.f32.mrb[0].mxu0
        %2233 = vmatprep.mubr.f32.mxu0 0.0
        %2234 = vmatmul.mubr.f32.gmra.mrb[0].mxu0 %v1922
        %v2235 = vpop.f32.mrb[0].mxu0
        %v2236 = vadd.f32 0.0, %v2235
        %v2237 = vpop.f32.mrb[0].mxu0
        %2238 = vmatprep.mubr.f32.mxu0 0.0
        %2239 = vmatmul.mubr.f32.gmra.mrb[0].mxu0 %v1925
        %v2240 = vpop.f32.mrb[0].mxu0
        %v2241 = vadd.f32 0.0, %v2240
        %v2242 = vpop.f32.mrb[0].mxu0
        %2243 = vmatprep.mubr.f32.mxu0 0.0
        %2244 = vmatmul.mubr.f32.gmra.mrb[0].mxu0 %v1928
        %v2245 = vpop.f32.mrb[0].mxu0
        %v2246 = vadd.f32 0.0, %v2245
        %v2247 = vpop.f32.mrb[0].mxu0
        %2248 = vmatprep.mubr.f32.mxu0 0.0
        %2249 = vmatmul.mubr.f32.gmra.mrb[0].mxu0 %v1931
        %v2250 = vpop.f32.mrb[0].mxu0
        %v2251 = vadd.f32 0.0, %v2250
        %v2252 = vpop.f32.mrb[0].mxu0
        %2253 = vmatprep.mubr.f32.mxu0 0.0
        %2254 = vmatmul.mubr.f32.gmra.mrb[0].mxu0 %v1934
        %v2255 = vpop.f32.mrb[0].mxu0
        %v2256 = vadd.f32 0.0, %v2255
        %v2257 = vpop.f32.mrb[0].mxu0
        %2258 = vmatprep.mubr.f32.mxu0 0.0
        %2259 = vmatmul.mubr.f32.gmra.mrb[0].mxu0 %v1937
        %v2260 = vpop.f32.mrb[0].mxu0
        %v2261 = vadd.f32 0.0, %v2260
        %v2262 = vpop.f32.mrb[0].mxu0
        %2263 = vmatprep.mubr.f32.mxu0 0.0
        %2264 = vmatmul.mubr.f32.gmra.mrb[0].mxu0 %v1940
        %v2265 = vpop.f32.mrb[0].mxu0
        %v2266 = vadd.f32 0.0, %v2265
        %v2267 = vpop.f32.mrb[0].mxu0
        %2268 = vmatprep.mubr.f32.mxu0 0.0
        %2269 = vmatmul.mubr.f32.gmra.mrb[0].mxu0 %v1943
        %v2270 = vpop.f32.mrb[0].mxu0
        %v2271 = vadd.f32 0.0, %v2270
        %v2272 = vpop.f32.mrb[0].mxu0
        %2273 = vmatprep.mubr.f32.mxu0 0.0
        %2274 = vmatmul.mubr.f32.gmra.mrb[0].mxu0 %v1946
        %v2275 = vpop.f32.mrb[0].mxu0
        %v2276 = vadd.f32 0.0, %v2275
        %v2277 = vpop.f32.mrb[0].mxu0
        %2278 = vmatprep.mubr.f32.mxu0 0.0
        %2279 = vmatmul.mubr.f32.gmra.mrb[0].mxu0 %v1949
        %v2280 = vpop.f32.mrb[0].mxu0
        %v2281 = vadd.f32 0.0, %v2280
        %v2282 = vpop.f32.mrb[0].mxu0
        %2283 = vmatprep.mubr.f32.mxu0 0.0
        %2284 = vmatmul.mubr.f32.gmra.mrb[0].mxu0 %v1952
        %v2285 = vpop.f32.mrb[0].mxu0
        %v2286 = vadd.f32 0.0, %v2285
        %v2287 = vpop.f32.mrb[0].mxu0
        %2288 = vmatprep.mubr.f32.mxu0 0.0
        %2289 = vmatmul.mubr.f32.gmra.mrb[0].mxu0 %v1955
        %v2290 = vpop.f32.mrb[0].mxu0
        %v2291 = vadd.f32 0.0, %v2290
        %v2292 = vpop.f32.mrb[0].mxu0
        %2293 = vmatprep.mubr.f32.mxu0 0.0
        %2294 = vmatmul.mubr.f32.gmra.mrb[0].mxu0 %v1958
        %v2295 = vpop.f32.mrb[0].mxu0
        %v2296 = vadd.f32 0.0, %v2295
        %v2297 = vpop.f32.mrb[0].mxu0
        %2298 = vmatprep.mubr.f32.mxu0 0.0
        %2299 = vmatmul.mubr.f32.gmra.mrb[0].mxu0 %v1961
        %v2300 = vpop.f32.mrb[0].mxu0
        %v2301 = vadd.f32 0.0, %v2300
        %v2302 = vpop.f32.mrb[0].mxu0
        %2303 = vmatprep.mubr.f32.mxu0 0.0
        %2304 = vmatmul.mubr.f32.gmra.mrb[0].mxu0 %v1964
        %v2305 = vpop.f32.mrb[0].mxu0
        %v2306 = vadd.f32 0.0, %v2305
        %v2307 = vpop.f32.mrb[0].mxu0
        %2308 = vmatprep.mubr.f32.mxu0 0.0
        %2309 = vmatmul.mubr.f32.gmra.mrb[0].mxu0 %v1967
        %v2310 = vpop.f32.mrb[0].mxu0
        %v2311 = vadd.f32 0.0, %v2310
        %v2312 = vpop.f32.mrb[0].mxu0
        %2313 = vmatprep.mubr.f32.mxu0 0.0
        %2314 = vmatmul.mubr.f32.gmra.mrb[0].mxu0 %v1970
        %v2315 = vpop.f32.mrb[0].mxu0
        %v2316 = vadd.f32 0.0, %v2315
        %v2317 = vpop.f32.mrb[0].mxu0
        %2318 = vmatprep.mubr.f32.mxu0 0.0
        %2319 = vmatmul.mubr.f32.gmra.mrb[0].mxu0 %v1973
        %v2320 = vpop.f32.mrb[0].mxu0
        %v2321 = vadd.f32 0.0, %v2320
        %v2322 = vpop.f32.mrb[0].mxu0
        %2323 = vmatprep.mubr.f32.mxu0 0.0
        %2324 = vmatmul.mubr.f32.gmra.mrb[0].mxu0 %v1976
        %v2325 = vpop.f32.mrb[0].mxu0
        %v2326 = vadd.f32 0.0, %v2325
        %v2327 = vpop.f32.mrb[0].mxu0
        %2328 = vmatprep.mubr.f32.mxu0 0.0
        %2329 = vmatmul.mubr.f32.gmra.mrb[0].mxu0 %v1979
        %v2330 = vpop.f32.mrb[0].mxu0
        %v2331 = vadd.f32 0.0, %v2330
        %v2332 = vpop.f32.mrb[0].mxu0
        %2333 = vmatprep.mubr.f32.mxu0 0.0
        %2334 = vmatmul.mubr.f32.gmra.mrb[0].mxu0 %v1982
        %v2335 = vpop.f32.mrb[0].mxu0
        %v2336 = vadd.f32 0.0, %v2335
        %v2337 = vpop.f32.mrb[0].mxu0
        %2338 = vmatprep.mubr.f32.mxu0 0.0
        %2339 = vmatmul.mubr.f32.gmra.mrb[0].mxu0 %v1985
        %v2340 = vpop.f32.mrb[0].mxu0
        %v2341 = vadd.f32 0.0, %v2340
        %v2342 = vpop.f32.mrb[0].mxu0
        %2343 = vmatprep.mubr.f32.mxu0 0.0
        %2344 = vmatmul.mubr.f32.gmra.mrb[0].mxu0 %v1988
        %v2345 = vpop.f32.mrb[0].mxu0
        %v2346 = vadd.f32 0.0, %v2345
        %v2347 = vpop.f32.mrb[0].mxu0
        %2348 = vmatprep.mubr.f32.mxu0 0.0
        %2349 = vmatmul.mubr.f32.gmra.mrb[0].mxu0 %v1991
        %v2350 = vpop.f32.mrb[0].mxu0
        %v2351 = vadd.f32 0.0, %v2350
        %v2352 = vpop.f32.mrb[0].mxu0
        %2353 = vmatprep.mubr.f32.mxu0 0.0
        %2354 = vmatmul.mubr.f32.gmra.mrb[0].mxu0 %v1994
        %v2355 = vpop.f32.mrb[0].mxu0
        %v2356 = vadd.f32 0.0, %v2355
        %v2357 = vpop.f32.mrb[0].mxu0
        %2358 = vmatprep.mubr.f32.mxu0 0.0
        %2359 = vmatmul.mubr.f32.gmra.mrb[0].mxu0 %v1997
        %v2360 = vpop.f32.mrb[0].mxu0
        %v2361 = vadd.f32 0.0, %v2360
        %v2362 = vpop.f32.mrb[0].mxu0
        %2363 = vmatprep.mubr.f32.mxu0 0.0
        %2364 = vmatmul.mubr.f32.gmra.mrb[0].mxu0 %v2000
        %v2365 = vpop.f32.mrb[0].mxu0
        %v2366 = vadd.f32 0.0, %v2365
        %v2367 = vpop.f32.mrb[0].mxu0
        %2368 = vmatprep.mubr.f32.mxu0 0.0
        %2369 = vmatmul.mubr.f32.gmra.mrb[0].mxu0 %v2003
        %v2370 = vpop.f32.mrb[0].mxu0
        %v2371 = vadd.f32 0.0, %v2370
        %v2372 = vpop.f32.mrb[0].mxu0
        %2373 = vmatprep.mubr.f32.mxu0 0.0
        %2374 = vmatmul.mubr.f32.gmra.mrb[0].mxu0 %v2006
        %v2375 = vpop.f32.mrb[0].mxu0
        %v2376 = vadd.f32 0.0, %v2375
        %v2377 = vpop.f32.mrb[0].mxu0
        %2378 = vmatprep.mubr.f32.mxu0 0.0
        %2379 = vmatmul.mubr.f32.gmra.mrb[0].mxu0 %v2009
        %v2380 = vpop.f32.mrb[0].mxu0
        %v2381 = vadd.f32 0.0, %v2380
        %v2382 = vpop.f32.mrb[0].mxu0
        %2383 = vmatprep.mubr.f32.mxu0 0.0
        %2384 = vmatmul.mubr.f32.gmra.mrb[0].mxu0 %v2012
        %v2385 = vpop.f32.mrb[0].mxu0
        %v2386 = vadd.f32 0.0, %v2385
        %v2387 = vpop.f32.mrb[0].mxu0
        %2388 = vmatprep.mubr.f32.mxu0 0.0
        %2389 = vmatmul.mubr.f32.gmra.mrb[0].mxu0 %v2015
        %v2390 = vpop.f32.mrb[0].mxu0
        %v2391 = vadd.f32 0.0, %v2390
        %v2392 = vpop.f32.mrb[0].mxu0
        %2393 = vmatprep.mubr.f32.mxu0 0.0
        %2394 = vmatmul.mubr.f32.gmra.mrb[0].mxu0 %v2018
        %v2395 = vpop.f32.mrb[0].mxu0
        %v2396 = vadd.f32 0.0, %v2395
        %v2397 = vpop.f32.mrb[0].mxu0
        %2398 = vmatprep.mubr.f32.mxu0 0.0
        %2399 = vmatmul.mubr.f32.gmra.mrb[0].mxu0 %v2021
        %v2400 = vpop.f32.mrb[0].mxu0
        %v2401 = vadd.f32 0.0, %v2400
        %v2402 = vpop.f32.mrb[0].mxu0
        %2403 = vmatprep.mubr.f32.mxu0 0.0
        %2404 = vmatmul.mubr.f32.gmra.mrb[0].mxu0 %v2024
        %v2405 = vpop.f32.mrb[0].mxu0
        %v2406 = vadd.f32 0.0, %v2405
        %v2407 = vpop.f32.mrb[0].mxu0
        %2408 = vmatprep.mubr.f32.mxu0 0.0
        %2409 = vmatmul.mubr.f32.gmra.mrb[0].mxu0 %v2027
        %v2410 = vpop.f32.mrb[0].mxu0
        %v2411 = vadd.f32 0.0, %v2410
        %v2412 = vpop.f32.mrb[0].mxu0
        %2413 = vdwg.mxu0
        %v2414 = vmul.f32 %v1709, %v2096
        %v2415 = vmul.f32 %v1710, %v2101
        %v2416 = vmul.f32 %v1711, %v2106
        %v2417 = vmul.f32 %v1712, %v2111
        %v2418 = vmul.f32 %v1713, %v2116
        %v2419 = vmul.f32 %v1714, %v2121
        %v2420 = vmul.f32 %v1715, %v2126
        %v2421 = vmul.f32 %v1716, %v2131
        %v2422 = vmul.f32 %v1717, %v2136
        %v2423 = vmul.f32 %v1718, %v2141
        %v2424 = vmul.f32 %v1719, %v2146
        %v2425 = vmul.f32 %v1720, %v2151
        %v2426 = vmul.f32 %v1721, %v2156
        %v2427 = vmul.f32 %v1722, %v2161
        %v2428 = vmul.f32 %v1723, %v2166
        %v2429 = vmul.f32 %v1724, %v2171
        %v2430 = vmul.f32 %v1725, %v2176
        %v2431 = vmul.f32 %v1726, %v2181
        %v2432 = vmul.f32 %v1727, %v2186
        %v2433 = vmul.f32 %v1728, %v2191
        %v2434 = vmul.f32 %v1729, %v2196
        %v2435 = vmul.f32 %v1730, %v2201
        %v2436 = vmul.f32 %v1731, %v2206
        %v2437 = vmul.f32 %v1732, %v2211
        %v2438 = vmul.f32 %v1733, %v2216
        %v2439 = vmul.f32 %v1734, %v2221
        %v2440 = vmul.f32 %v1735, %v2226
        %v2441 = vmul.f32 %v1736, %v2231
        %v2442 = vmul.f32 %v1737, %v2236
        %v2443 = vmul.f32 %v1738, %v2241
        %v2444 = vmul.f32 %v1739, %v2246
        %v2445 = vmul.f32 %v1740, %v2251
        %v2446 = vmul.f32 %v1741, %v2256
        %v2447 = vmul.f32 %v1742, %v2261
        %v2448 = vmul.f32 %v1743, %v2266
        %v2449 = vmul.f32 %v1744, %v2271
        %v2450 = vmul.f32 %v1745, %v2276
        %v2451 = vmul.f32 %v1746, %v2281
        %v2452 = vmul.f32 %v1747, %v2286
        %v2453 = vmul.f32 %v1748, %v2291
        %v2454 = vmul.f32 %v1749, %v2296
        %v2455 = vmul.f32 %v1750, %v2301
        %v2456 = vmul.f32 %v1751, %v2306
        %v2457 = vmul.f32 %v1752, %v2311
        %v2458 = vmul.f32 %v1753, %v2316
        %v2459 = vmul.f32 %v1754, %v2321
        %v2460 = vmul.f32 %v1755, %v2326
        %v2461 = vmul.f32 %v1756, %v2331
        %v2462 = vmul.f32 %v1757, %v2336
        %v2463 = vmul.f32 %v1758, %v2341
        %v2464 = vmul.f32 %v1759, %v2346
        %v2465 = vmul.f32 %v1760, %v2351
        %v2466 = vmul.f32 %v1761, %v2356
        %v2467 = vmul.f32 %v1762, %v2361
        %v2468 = vmul.f32 %v1763, %v2366
        %v2469 = vmul.f32 %v1764, %v2371
        %v2470 = vmul.f32 %v1765, %v2376
        %v2471 = vmul.f32 %v1766, %v2381
        %v2472 = vmul.f32 %v1767, %v2386
        %v2473 = vmul.f32 %v1768, %v2391
        %v2474 = vmul.f32 %v1769, %v2396
        %v2475 = vmul.f32 %v1770, %v2401
        %v2476 = vmul.f32 %v1771, %v2406
        %v2477 = vmul.f32 %v1772, %v2411
        %v2478 = vld [vmem:[%s252] sm:$0xff]
        %v2479 = vpack.c.bf16 %v2415, %v2414
        %v2480 = vpack.c.bf16 %v2417, %v2416
        %v2481 = vpack.c.bf16 %v2419, %v2418
        %v2482 = vpack.c.bf16 %v2421, %v2420
        %v2483 = vpack.c.bf16 %v2423, %v2422
        %v2484 = vpack.c.bf16 %v2425, %v2424
        %v2485 = vpack.c.bf16 %v2427, %v2426
        %v2486 = vpack.c.bf16 %v2429, %v2428
        %v2487 = vpack.c.bf16 %v2431, %v2430
        %v2488 = vpack.c.bf16 %v2433, %v2432
        %v2489 = vpack.c.bf16 %v2435, %v2434
        %v2490 = vpack.c.bf16 %v2437, %v2436
        %v2491 = vpack.c.bf16 %v2439, %v2438
        %v2492 = vpack.c.bf16 %v2441, %v2440
        %v2493 = vpack.c.bf16 %v2443, %v2442
        %v2494 = vpack.c.bf16 %v2445, %v2444
        %v2495 = vpack.c.bf16 %v2447, %v2446
        %v2496 = vpack.c.bf16 %v2449, %v2448
        %v2497 = vpack.c.bf16 %v2451, %v2450
        %v2498 = vpack.c.bf16 %v2453, %v2452
        %v2499 = vpack.c.bf16 %v2455, %v2454
        %v2500 = vpack.c.bf16 %v2457, %v2456
        %v2501 = vpack.c.bf16 %v2459, %v2458
        %v2502 = vpack.c.bf16 %v2461, %v2460
        %v2503 = vpack.c.bf16 %v2463, %v2462
        %v2504 = vpack.c.bf16 %v2465, %v2464
        %v2505 = vpack.c.bf16 %v2467, %v2466
        %v2506 = vpack.c.bf16 %v2469, %v2468
        %v2507 = vpack.c.bf16 %v2471, %v2470
        %v2508 = vpack.c.bf16 %v2473, %v2472
        %v2509 = vpack.c.bf16 %v2475, %v2474
        %v2510 = vpack.c.bf16 %v2477, %v2476
        %v2512 = vcombine.high %v2478, %v2478
        %v2514 = vunpack.c.l.s4 1983009808
        %v2515 = vunpack.c.0.s8 %v2514
        %v2516 = vlaneseq
        %v2517 = vshrl.u32 %v2516, 7
        %v2518 = vsub.s32 %v2515, %v2517
        %v2519 = vrot.slane %v2478, %v2518
        %v2521 = vunpack.c.l.s4 1983009808
        %v2522 = vunpack.c.0.s8 %v2521
        %v2523 = vlaneseq
        %v2524 = vshrl.u32 %v2523, 7
        %v2525 = vsub.s32 %v2522, %v2524
        %v2526 = vrot.slane %v2512, %v2525
        %v2527 = vcombine.high %v2519, %v2519
        %v2528 = vcombine.high %v2526, %v2526
        %2533 = vmatprep.subr.bf16.mxu0 0
        %2534 = vmatpush1.bf16.msra.mxu0 %v2479
        %2535 = vmatprep.subr.bf16.mxu0 0
        %2536 = vmatpush1.bf16.msra.mxu0 %v2480
        %2537 = vmatprep.subr.bf16.mxu0 0
        %2538 = vmatpush1.bf16.msra.mxu0 %v2481
        %2539 = vmatprep.subr.bf16.mxu0 0
        %2540 = vmatpush1.bf16.msra.mxu0 %v2482
        %2541 = vmatprep.subr.bf16.mxu0 0
        %2542 = vmatpush1.bf16.msra.mxu0 %v2483
        %2543 = vmatprep.subr.bf16.mxu0 0
        %2544 = vmatpush1.bf16.msra.mxu0 %v2484
        %2545 = vmatprep.subr.bf16.mxu0 0
        %2546 = vmatpush1.bf16.msra.mxu0 %v2485
        %2547 = vmatprep.subr.bf16.mxu0 0
        %2548 = vmatpush1.bf16.msra.mxu0 %v2486
        %2549 = vmatprep.subr.bf16.mxu0 0
        %2550 = vmatpush1.bf16.msra.mxu0 %v2487
        %2551 = vmatprep.subr.bf16.mxu0 0
        %2552 = vmatpush1.bf16.msra.mxu0 %v2488
        %2553 = vmatprep.subr.bf16.mxu0 0
        %2554 = vmatpush1.bf16.msra.mxu0 %v2489
        %2555 = vmatprep.subr.bf16.mxu0 0
        %2556 = vmatpush1.bf16.msra.mxu0 %v2490
        %2557 = vmatprep.subr.bf16.mxu0 0
        %2558 = vmatpush1.bf16.msra.mxu0 %v2491
        %2559 = vmatprep.subr.bf16.mxu0 0
        %2560 = vmatpush1.bf16.msra.mxu0 %v2492
        %2561 = vmatprep.subr.bf16.mxu0 0
        %2562 = vmatpush1.bf16.msra.mxu0 %v2493
        %2563 = vmatprep.subr.bf16.mxu0 0
        %2564 = vmatpush1.bf16.msra.mxu0 %v2494
        %2565 = vmatprep.mubr.bf16.mxu0 %v2527
        %2566 = vmatmul.mubr.bf16.gmra.mrb[0].mxu0 %v2519
        %v2567 = vpop.f32.mrb[0].mxu0
        %v2568 = vadd.f32 0.0, %v2567
        %v2569 = vpop.f32.mrb[0].mxu0
        %v2570 = vpop.f32.mrb[0].mxu0
        %v2571 = vpop.f32.mrb[0].mxu0
        %2572 = vdwg.mxu0
        %2573 = vmatprep.subr.bf16.mxu0 0
        %2574 = vmatpush1.bf16.msra.mxu0 %v2495
        %2575 = vmatprep.subr.bf16.mxu0 0
        %2576 = vmatpush1.bf16.msra.mxu0 %v2496
        %2577 = vmatprep.subr.bf16.mxu0 0
        %2578 = vmatpush1.bf16.msra.mxu0 %v2497
        %2579 = vmatprep.subr.bf16.mxu0 0
        %2580 = vmatpush1.bf16.msra.mxu0 %v2498
        %2581 = vmatprep.subr.bf16.mxu0 0
        %2582 = vmatpush1.bf16.msra.mxu0 %v2499
        %2583 = vmatprep.subr.bf16.mxu0 0
        %2584 = vmatpush1.bf16.msra.mxu0 %v2500
        %2585 = vmatprep.subr.bf16.mxu0 0
        %2586 = vmatpush1.bf16.msra.mxu0 %v2501
        %2587 = vmatprep.subr.bf16.mxu0 0
        %2588 = vmatpush1.bf16.msra.mxu0 %v2502
        %2589 = vmatprep.subr.bf16.mxu0 0
        %2590 = vmatpush1.bf16.msra.mxu0 %v2503
        %2591 = vmatprep.subr.bf16.mxu0 0
        %2592 = vmatpush1.bf16.msra.mxu0 %v2504
        %2593 = vmatprep.subr.bf16.mxu0 0
        %2594 = vmatpush1.bf16.msra.mxu0 %v2505
        %2595 = vmatprep.subr.bf16.mxu0 0
        %2596 = vmatpush1.bf16.msra.mxu0 %v2506
        %2597 = vmatprep.subr.bf16.mxu0 0
        %2598 = vmatpush1.bf16.msra.mxu0 %v2507
        %2599 = vmatprep.subr.bf16.mxu0 0
        %2600 = vmatpush1.bf16.msra.mxu0 %v2508
        %2601 = vmatprep.subr.bf16.mxu0 0
        %2602 = vmatpush1.bf16.msra.mxu0 %v2509
        %2603 = vmatprep.subr.bf16.mxu0 0
        %2604 = vmatpush1.bf16.msra.mxu0 %v2510
        %2605 = vmatprep.mubr.bf16.mxu0 %v2528
        %2606 = vmatmul.mubr.bf16.gmra.mrb[0].mxu0 %v2526
        %v2607 = vpop.f32.mrb[0].mxu0
        %v2608 = vadd.f32 %v2568, %v2607
        %v2609 = vpop.f32.mrb[0].mxu0
        %v2610 = vpop.f32.mrb[0].mxu0
        %v2611 = vpop.f32.mrb[0].mxu0
        %2612 = vdwg.mxu0
        %2613 = vst [vmem:[%s242] sm:$0xf] %v2608
        %s2614 = sand.u32 %s151, 1
        %s2615 = scalar_lea.sflag [#allocation5], %s2614
        %s2616 = sand.u32 %s151, 1
        %s2617 = smul.addr %s2616, 4
        %s2618 = scalar_lea.vmem [#allocation4], %s2617
        // Predicated region
        $region41: #{tpu_custom_call.1} parent=39 // pred_check
          %p2619 = pneg %p161
        $region42: #{tpu_custom_call.1} parent=39 // pred_check_branch
          %2621 = sbr.rel (%p2619) target = $region44
        $region43: #{tpu_custom_call.1} parent=39 // pred_region
          %s2623 = ssub.s32 64, 64
          %2624 = vsyncadd %s2615, %s2623
          %s2625 = smul.addr %s26, 64
          %s2626 = scalar_lea.hbm %s6, %s2625
          %s2628 = sshll.u32 %s2618, 4
          %s2629 = int_to_ptr.vmem [resolvable:$true] %s2628
          %2631 = dma.vmem_to_hbm [thread:$0]  %s2629, 64, %s2626, %s2615
        $region44: #{tpu_custom_call.1} parent=39 // pred_fallthru
          _
      $region40: #{tpu_custom_call.1} parent=5 // pred_fallthru
        _
      %p2632 = scmp.le.s32.totalorder 2, %s21
      // Predicated region
      $region45: #{tpu_custom_call.1} parent=5 // pred_check
        %p2633 = pneg %p2632
      $region46: #{tpu_custom_call.1} parent=5 // pred_check_branch
        %2635 = sbr.rel (%p2633) target = $region48
      $region47: #{tpu_custom_call.1} parent=5 // pred_region
        %s2636 = ssub.s32 %s21, 2
        // Predicated region
        $region49: #{tpu_custom_call.1} parent=47 // pred_check
          %p2637 = pneg %p167
        $region50: #{tpu_custom_call.1} parent=47 // pred_check_branch
          %2639 = sbr.rel (%p2637) target = $region52
        $region51: #{tpu_custom_call.1} parent=47 // pred_region
          %s2640 = sand.u32 %s152, 1
          %s2641 = scalar_lea.sflag [#allocation5], %s2640
          %s2642 = sand.u32 %s152, 1
          %s2643 = smul.addr %s2642, 4
          %s2644 = scalar_lea.vmem [#allocation4], %s2643
          %2645 = dma.done %s2641, 64
        $region52: #{tpu_custom_call.1} parent=47 // pred_fallthru
          _
      $region48: #{tpu_custom_call.1} parent=5 // pred_fallthru
        _
    $region6: #{tpu_custom_call.1} parent=1 // loop_footer
      %s25 = sadd.s32 1, %s21
    $region7: #{tpu_custom_call.1} parent=1 // loop_footer_branch
      %20 = sbr.rel target = $region3
    $region8: #{tpu_custom_call.1} parent=1 // loop_exit
      _
    %2646 = vsyncpa [#allocation5], 1
    %s2647 = scalar_lea.sflag [#allocation5], 1
    %2648 = vsyncpa %s2647, 1

</llo_original>
